<compile_context>
chip_gen: v5e
topology: v5e:2x2
jax: 0.10.0
libtpu: 0.0.40
codegen_flags: <defaults>
</compile_context>

<pallas_src>
import functools

import jax
import jax.numpy as jnp
from jax import lax
from jax.experimental import pallas as pl
from jax.experimental.pallas import tpu as pltpu


# ------------------------------ fused kernel -------------------------------

def _kh_concat(x, H):
    """x: (R, L) with R = (#images)*H image rows stacked along sublanes.

    Returns (R, 3L) = [x_up | x | x_down] where x_up[r] = x[r-1] and
    x_down[r] = x[r+1], zeroed wherever the shifted row would cross an image
    boundary (i.e. the 3x3 'same' conv zero padding in the H direction).
    The rolls go to the XLU and the masks to the VPU — no MXU work."""
    R, L = x.shape
    row_in_img = lax.broadcasted_iota(jnp.int32, (R, L), 0) % H
    x_up = jnp.where(row_in_img != 0, pltpu.roll(x, shift=1, axis=0), 0.0)
    x_down = jnp.where(row_in_img != (H - 1),
                       pltpu.roll(x, shift=R - 1, axis=0), 0.0)
    return jnp.concatenate([x_up, x, x_down], axis=-1)


def _cross_block_kernel(x_ref, wt1_ref, ws1_ref, b1_ref, w2_ref, bt_ref,
                        bs_ref, t_out_ref, s_out_ref, *, B, S, H, fuse_convs):
    # x_ref  : (B*H + B*S*H, W*C)   target rows (per batch) then support rows
    # wt1_ref: (3*W*C,  W*Cf)       cross-conv weights, target-channel half
    # ws1_ref: (3*W*C,  W*Cf)       cross-conv weights, support-channel half
    # w2_ref : (3*W*Cf, 2*W*Cv)     [support_conv | target_conv] stacked on N
    # b*_ref : (1, W*C?)            per-channel bias tiled across W
    f32 = jnp.float32
    BH = B * H
    BSH = B * S * H
    WCv = bt_ref.shape[-1]

    x = x_ref[...].astype(f32)                     # (B*H + B*S*H, W*C)
    xcat = _kh_concat(x, H)                        # (B*H + B*S*H, 3*W*C)

    # ---- CrossConv2d, split into target / support channel halves ----------
    ct = jnp.dot(xcat[:BH], wt1_ref[...], preferred_element_type=f32)  # (B*H, W*Cf)
    cs = jnp.dot(xcat[BH:], ws1_ref[...], preferred_element_type=f32)  # (B*S*H, W*Cf)

    # broadcast the per-batch target contribution over the S support items
    ct_rep = jnp.concatenate(
        [ct[b * H:(b + 1) * H] for b in range(B) for _ in range(S)], axis=0)
    inter = cs + ct_rep + b1_ref[...]              # (B*S*H, W*Cf)

    # ---- aggregated target = mean over the support group (per batch) ------
    agg_parts = []
    for b in range(B):
        base = b * S * H
        acc = inter[base:base + H]
        for s in range(1, S):
            acc = acc + inter[base + s * H:base + (s + 1) * H]
        agg_parts.append(acc * (1.0 / S))
    agg = jnp.concatenate(agg_parts, axis=0)       # (B*H, W*Cf)

    # ---- ConvOps: support conv on `inter`, target conv on `agg` ------------
    inter_cat = _kh_concat(inter, H)               # (B*S*H, 3*W*Cf)
    agg_cat = _kh_concat(agg, H)                   # (B*H,   3*W*Cf)

    if fuse_convs:
        # One (M = B*(S+1)*H, K = 3*W*Cf, N = 2*W*Cv) matmul fills the
        # 256-wide MXU on v6e/v7x; slice the two results back out.
        both = jnp.dot(jnp.concatenate([inter_cat, agg_cat], axis=0),
                       w2_ref[...], preferred_element_type=f32)
        s_res = both[:BSH, :WCv]
        t_res = both[BSH:, WCv:]
    else:
        # v5e (128-wide MXU): keep the two convs as separate matmuls.
        s_res = jnp.dot(inter_cat, w2_ref[:, :WCv], preferred_element_type=f32)
        t_res = jnp.dot(agg_cat, w2_ref[:, WCv:], preferred_element_type=f32)

    t_out_ref[...] = (t_res + bt_ref[...]).astype(t_out_ref.dtype)
    s_out_ref[...] = (s_res + bs_ref[...]).astype(s_out_ref.dtype)


# ------------------------ wrapper-side weight folding ------------------------

def _fold_conv3x3(w, W):
    """Fold the kw taps (+ W-direction zero padding) into banded matrices and
    stack the kh taps along the contraction dimension.
    w: (3, 3, Cin, Cout)  ->  (3*W*Cin, W*Cout), kh-major along rows."""
    mats = []
    for kh in range(3):
        m = None
        for kw in range(3):
            # eye(W, k=1-kw)[w_in, w_out] = 1  iff  w_in == w_out + (kw - 1)
            band = jnp.kron(jnp.eye(W, k=1 - kw, dtype=jnp.float32),
                            w[kh, kw].astype(jnp.float32))
            m = band if m is None else m + band
        mats.append(m)
    return jnp.concatenate(mats, axis=0)


def _tile_bias(b, W):
    return jnp.tile(b.astype(jnp.float32), W).reshape(1, W * b.shape[0])


def fold_cross_block_params(params, W):
    """Precompute all lane-aligned matmul operands ONCE (init time)."""
    C = params["cross_w"].shape[2] // 2
    ws2 = _fold_conv3x3(params["support_w"], W)
    wt2 = _fold_conv3x3(params["target_w"], W)
    return {
        "wt1": _fold_conv3x3(params["cross_w"][:, :, :C, :], W),
        "ws1": _fold_conv3x3(params["cross_w"][:, :, C:, :], W),
        "b1": _tile_bias(params["cross_b"], W),
        "w2": jnp.concatenate([ws2, wt2], axis=1),   # (3*W*Cf, 2*W*Cv)
        "bt": _tile_bias(params["target_b"], W),
        "bs": _tile_bias(params["support_b"], W),
    }


def _default_fuse_convs():
    try:
        kind = jax.devices()[0].device_kind.lower()
    except Exception:
        return True
    # 256-wide MXU generations (v6e/v7x) process N=256 at no extra pass cost;
    # the 128-wide MXUs would pay real work for the wasted cross terms.
    return not any(v in kind for v in ("v2", "v3", "v4", "v5"))


# ------------------------------ CrossBlock ---------------------------------

def init_cross_block_params(key, in_channels, cross_features, conv_features=None,
                            dtype=jnp.float32):
    conv_features = conv_features or cross_features
    k1, k2, k3, k4, k5, k6 = jax.random.split(key, 6)

    def w(k, cin, cout):
        return (jax.random.normal(k, (3, 3, cin, cout), dtype) *
                (1.0 / jnp.sqrt(9.0 * cin)))

    def b(k, cout):
        return jax.random.normal(k, (cout,), dtype) * 0.01

    return {
        # CrossConv2d: combined channels = 2 * in_channels (target first)
        "cross_w": w(k1, 2 * in_channels, cross_features),
        "cross_b": b(k2, cross_features),
        "target_w": w(k3, cross_features, conv_features),
        "target_b": b(k4, conv_features),
        "support_w": w(k5, cross_features, conv_features),
        "support_b": b(k6, conv_features),
    }


def cross_block_forward(folded, target, support, *, fuse_convs=None):
    """target: [B, 1, C, H, W], support: [B, S, C, H, W] (grouped NCHW).

    Returns (target_out [B, 1, Cv, H, W], support_out [B, S, Cv, H, W]).
    `folded` comes from fold_cross_block_params (computed once at init)."""
    B, T, C, H, W = target.shape
    assert T == 1, "CrossBlock semantics require target group size 1"
    S = support.shape[1]
    out_dtype = target.dtype
    WCv = folded["bt"].shape[-1]
    Cv = WCv // W
    if fuse_convs is None:
        fuse_convs = _default_fuse_convs()

    # Glue: grouped NCHW -> lane-dense rows (lane = w*C + c), target rows for
    # every batch first, then all support rows; B folded into the sublane axis.
    # (At the test shapes W*Cf = W*Cv = 128, so every matmul output is a full
    #  unmasked 128-lane slab; other W/C stay correct, just less lane-dense.)
    xt = jnp.transpose(target[:, 0], (0, 2, 3, 1)).reshape(B * H, W * C)
    xs = jnp.transpose(support, (0, 1, 3, 4, 2)).reshape(B * S * H, W * C)
    x_in = jnp.concatenate([xt, xs], axis=0).astype(jnp.float32)

    kernel = functools.partial(_cross_block_kernel, B=B, S=S, H=H,
                               fuse_convs=fuse_convs)
    vmem = lambda: pl.BlockSpec(memory_space=pltpu.MemorySpace.VMEM)
    t_out, s_out = pl.pallas_call(
        kernel,
        out_shape=(jax.ShapeDtypeStruct((B * H, WCv), out_dtype),
                   jax.ShapeDtypeStruct((B * S * H, WCv), out_dtype)),
        in_specs=[vmem() for _ in range(7)],
        out_specs=(vmem(), vmem()),
    )(x_in, folded["wt1"], folded["ws1"], folded["b1"], folded["w2"],
      folded["bt"], folded["bs"])

    # Glue: back to grouped NCHW.
    t_out = t_out.reshape(B, 1, H, W, Cv).transpose(0, 1, 4, 2, 3)
    s_out = s_out.reshape(B, S, H, W, Cv).transpose(0, 1, 4, 2, 3)
    return t_out, s_out


# --------------------------- pure-JAX reference -----------------------------

def _ref_conv3x3(x_nhwc, w, b):
    y = jax.lax.conv_general_dilated(
        x_nhwc, w, window_strides=(1, 1), padding="SAME",
        dimension_numbers=("NHWC", "HWIO", "NHWC"),
        precision=jax.lax.Precision.HIGHEST)
    return y + b[None, None, None, :]


def cross_block_ref(params, target, support):
    B, T, C, H, W = target.shape
    S = support.shape[1]
    t = jnp.transpose(target, (0, 1, 3, 4, 2))
    s = jnp.transpose(support, (0, 1, 3, 4, 2))
    t_exp = jnp.broadcast_to(t, (B, S, H, W, C))
    x = jnp.concatenate([t_exp, s], axis=-1).reshape(B * S, H, W, 2 * C)
    inter = _ref_conv3x3(x, params["cross_w"], params["cross_b"])
    Cf = inter.shape[-1]
    inter = inter.reshape(B, S, H, W, Cf)
    agg = jnp.mean(inter, axis=1)
    t_out = _ref_conv3x3(agg, params["target_w"], params["target_b"])
    Cv = t_out.shape[-1]
    t_out = t_out.reshape(B, 1, H, W, Cv)
    s_out = _ref_conv3x3(inter.reshape(B * S, H, W, Cf),
                         params["support_w"], params["support_b"])
    s_out = s_out.reshape(B, S, H, W, Cv)
    return (jnp.transpose(t_out, (0, 1, 4, 2, 3)),
            jnp.transpose(s_out, (0, 1, 4, 2, 3)))


# ----------------------------------- main -----------------------------------

if __name__ == "__main__":
    B, T, S, C, H, W = 2, 1, 3, 4, 16, 16
    cross_features, conv_features = 8, 8

    key = jax.random.PRNGKey(0)
    kp, kt, ks = jax.random.split(key, 3)
    params = init_cross_block_params(kp, C, cross_features, conv_features)
    target = jax.random.normal(kt, (B, T, C, H, W), jnp.float32)
    support = jax.random.normal(ks, (B, S, C, H, W), jnp.float32)

    folded = fold_cross_block_params(params, W)      # once, at init time
    fwd = jax.jit(cross_block_forward)
    t_out, s_out = fwd(folded, target, support)
    jax.block_until_ready((t_out, s_out))

    # sanity check vs pure-JAX reference
    t_ref, s_ref = cross_block_ref(params, target, support)
    assert t_out.shape == (B, 1, conv_features, H, W)
    assert s_out.shape == (B, S, conv_features, H, W)
    assert jnp.allclose(t_out, t_ref, atol=1e-4, rtol=1e-4)
    assert jnp.allclose(s_out, s_ref, atol=1e-4, rtol=1e-4)

    print("KERNEL_OK")
</pallas_src>

<mosaic_0001>
module attributes {stable_mosaic.version = 11 : i64} {
  func.func @_cross_block_kernel(%arg0: memref<128x64xf32, #tpu.memory_space<vmem>>, %arg1: memref<192x128xf32, #tpu.memory_space<vmem>>, %arg2: memref<192x128xf32, #tpu.memory_space<vmem>>, %arg3: memref<1x128xf32, #tpu.memory_space<vmem>>, %arg4: memref<384x256xf32, #tpu.memory_space<vmem>>, %arg5: memref<1x128xf32, #tpu.memory_space<vmem>>, %arg6: memref<1x128xf32, #tpu.memory_space<vmem>>, %arg7: memref<32x128xf32, #tpu.memory_space<vmem>>, %arg8: memref<96x128xf32, #tpu.memory_space<vmem>>) attributes {dimension_semantics = [], scalar_prefetch = 0 : i64, scratch_operands = 0 : i64, tpu.core_type = #tpu.core_type<tc>} {
    %c0 = arith.constant 0 : index
    %c0_0 = arith.constant 0 : index
    %0 = vector.load %arg0[%c0, %c0_0] : memref<128x64xf32, #tpu.memory_space<vmem>>, vector<128x64xf32>
    %1 = tpu.iota {dimensions = array<i32: 0>} : vector<128x64xi32>
    %c16_i32 = arith.constant 16 : i32
    %c0_i32 = arith.constant 0 : i32
    %2 = arith.cmpi eq, %c16_i32, %c0_i32 : i32
    %c1_i32 = arith.constant 1 : i32
    %3 = arith.select %2, %c1_i32, %c16_i32 : i32
    %4 = vector.broadcast %3 : i32 to vector<128x64xi32>
    %5 = arith.remsi %1, %4 : vector<128x64xi32>
    %c0_i32_1 = arith.constant 0 : i32
    %6 = vector.broadcast %c0_i32_1 : i32 to vector<128x64xi32>
    %7 = arith.cmpi ne, %5, %6 : vector<128x64xi32>
    %c0_i32_2 = arith.constant 0 : i32
    %8 = vector.broadcast %c0_i32_2 : i32 to vector<128x64xi32>
    %9 = arith.cmpi slt, %5, %8 : vector<128x64xi32>
    %c0_i32_3 = arith.constant 0 : i32
    %10 = arith.cmpi slt, %3, %c0_i32_3 : i32
    %11 = vector.broadcast %10 : i1 to vector<128x64xi1>
    %12 = vector.broadcast %11 : vector<128x64xi1> to vector<128x64xi1>
    %13 = arith.xori %9, %12 : vector<128x64xi1>
    %14 = arith.andi %13, %7 : vector<128x64xi1>
    %15 = vector.broadcast %3 : i32 to vector<128x64xi32>
    %16 = arith.addi %5, %15 : vector<128x64xi32>
    %17 = arith.select %14, %16, %5 : vector<128x64xi1>, vector<128x64xi32>
    %c0_i32_4 = arith.constant 0 : i32
    %18 = vector.broadcast %c0_i32_4 : i32 to vector<128x64xi32>
    %19 = arith.cmpi ne, %17, %18 : vector<128x64xi32>
    %c1_i32_5 = arith.constant 1 : i32
    %20 = tpu.dynamic_rotate %0 by %c1_i32_5 dim 0 : vector<128x64xf32>, i32 -> vector<128x64xf32>
    %cst = arith.constant 0.000000e+00 : f32
    %21 = vector.broadcast %cst : f32 to vector<128x64xf32>
    %22 = arith.select %19, %20, %21 : vector<128x64xi1>, vector<128x64xf32>
    %c15_i32 = arith.constant 15 : i32
    %23 = vector.broadcast %c15_i32 : i32 to vector<128x64xi32>
    %24 = arith.cmpi ne, %17, %23 : vector<128x64xi32>
    %c127_i32 = arith.constant 127 : i32
    %25 = tpu.dynamic_rotate %0 by %c127_i32 dim 0 : vector<128x64xf32>, i32 -> vector<128x64xf32>
    %cst_6 = arith.constant 0.000000e+00 : f32
    %26 = vector.broadcast %cst_6 : f32 to vector<128x64xf32>
    %27 = arith.select %24, %25, %26 : vector<128x64xi1>, vector<128x64xf32>
    %28 = tpu.concatenate %22, %0, %27 in 1 : vector<128x64xf32>, vector<128x64xf32>, vector<128x64xf32> -> vector<128x192xf32>
    %29 = vector.extract_strided_slice %28 {offsets = [0, 0], sizes = [32, 192], strides = [1, 1]} : vector<128x192xf32> to vector<32x192xf32>
    %c0_7 = arith.constant 0 : index
    %c0_8 = arith.constant 0 : index
    %30 = vector.load %arg1[%c0_7, %c0_8] : memref<192x128xf32, #tpu.memory_space<vmem>>, vector<192x128xf32>
    %cst_9 = arith.constant dense<0.000000e+00> : vector<32x128xf32>
    %31 = tpu.matmul %29, %30, %cst_9 {dimension_numbers = #tpu.dot_dimension_numbers<[1], [0], [0], [1], [0, 0, 1, 1], [], []>} : vector<32x192xf32>, vector<192x128xf32>, vector<32x128xf32> -> vector<32x128xf32>
    %32 = vector.extract_strided_slice %28 {offsets = [32, 0], sizes = [96, 192], strides = [1, 1]} : vector<128x192xf32> to vector<96x192xf32>
    %c0_10 = arith.constant 0 : index
    %c0_11 = arith.constant 0 : index
    %33 = vector.load %arg2[%c0_10, %c0_11] : memref<192x128xf32, #tpu.memory_space<vmem>>, vector<192x128xf32>
    %cst_12 = arith.constant dense<0.000000e+00> : vector<96x128xf32>
    %34 = tpu.matmul %32, %33, %cst_12 {dimension_numbers = #tpu.dot_dimension_numbers<[1], [0], [0], [1], [0, 0, 1, 1], [], []>} : vector<96x192xf32>, vector<192x128xf32>, vector<96x128xf32> -> vector<96x128xf32>
    %35 = vector.extract_strided_slice %31 {offsets = [0, 0], sizes = [16, 128], strides = [1, 1]} : vector<32x128xf32> to vector<16x128xf32>
    %36 = vector.extract_strided_slice %31 {offsets = [0, 0], sizes = [16, 128], strides = [1, 1]} : vector<32x128xf32> to vector<16x128xf32>
    %37 = vector.extract_strided_slice %31 {offsets = [0, 0], sizes = [16, 128], strides = [1, 1]} : vector<32x128xf32> to vector<16x128xf32>
    %38 = vector.extract_strided_slice %31 {offsets = [16, 0], sizes = [16, 128], strides = [1, 1]} : vector<32x128xf32> to vector<16x128xf32>
    %39 = vector.extract_strided_slice %31 {offsets = [16, 0], sizes = [16, 128], strides = [1, 1]} : vector<32x128xf32> to vector<16x128xf32>
    %40 = vector.extract_strided_slice %31 {offsets = [16, 0], sizes = [16, 128], strides = [1, 1]} : vector<32x128xf32> to vector<16x128xf32>
    %41 = tpu.concatenate %35, %36, %37, %38, %39, %40 in 0 : vector<16x128xf32>, vector<16x128xf32>, vector<16x128xf32>, vector<16x128xf32>, vector<16x128xf32>, vector<16x128xf32> -> vector<96x128xf32>
    %42 = arith.addf %34, %41 : vector<96x128xf32>
    %c0_13 = arith.constant 0 : index
    %c0_14 = arith.constant 0 : index
    %43 = vector.load %arg3[%c0_13, %c0_14] : memref<1x128xf32, #tpu.memory_space<vmem>>, vector<1x128xf32>
    %44 = vector.broadcast %43 : vector<1x128xf32> to vector<96x128xf32>
    %45 = arith.addf %42, %44 : vector<96x128xf32>
    %46 = vector.extract_strided_slice %45 {offsets = [0, 0], sizes = [16, 128], strides = [1, 1]} : vector<96x128xf32> to vector<16x128xf32>
    %47 = vector.extract_strided_slice %45 {offsets = [16, 0], sizes = [16, 128], strides = [1, 1]} : vector<96x128xf32> to vector<16x128xf32>
    %48 = arith.addf %46, %47 : vector<16x128xf32>
    %49 = vector.extract_strided_slice %45 {offsets = [32, 0], sizes = [16, 128], strides = [1, 1]} : vector<96x128xf32> to vector<16x128xf32>
    %50 = arith.addf %48, %49 : vector<16x128xf32>
    %cst_15 = arith.constant 0.333333343 : f32
    %51 = vector.broadcast %cst_15 : f32 to vector<16x128xf32>
    %52 = arith.mulf %50, %51 : vector<16x128xf32>
    %53 = vector.extract_strided_slice %45 {offsets = [48, 0], sizes = [16, 128], strides = [1, 1]} : vector<96x128xf32> to vector<16x128xf32>
    %54 = vector.extract_strided_slice %45 {offsets = [64, 0], sizes = [16, 128], strides = [1, 1]} : vector<96x128xf32> to vector<16x128xf32>
    %55 = arith.addf %53, %54 : vector<16x128xf32>
    %56 = vector.extract_strided_slice %45 {offsets = [80, 0], sizes = [16, 128], strides = [1, 1]} : vector<96x128xf32> to vector<16x128xf32>
    %57 = arith.addf %55, %56 : vector<16x128xf32>
    %cst_16 = arith.constant 0.333333343 : f32
    %58 = vector.broadcast %cst_16 : f32 to vector<16x128xf32>
    %59 = arith.mulf %57, %58 : vector<16x128xf32>
    %60 = tpu.concatenate %52, %59 in 0 : vector<16x128xf32>, vector<16x128xf32> -> vector<32x128xf32>
    %61 = tpu.iota {dimensions = array<i32: 0>} : vector<96x128xi32>
    %c16_i32_17 = arith.constant 16 : i32
    %c0_i32_18 = arith.constant 0 : i32
    %62 = arith.cmpi eq, %c16_i32_17, %c0_i32_18 : i32
    %c1_i32_19 = arith.constant 1 : i32
    %63 = arith.select %62, %c1_i32_19, %c16_i32_17 : i32
    %64 = vector.broadcast %63 : i32 to vector<96x128xi32>
    %65 = arith.remsi %61, %64 : vector<96x128xi32>
    %c0_i32_20 = arith.constant 0 : i32
    %66 = vector.broadcast %c0_i32_20 : i32 to vector<96x128xi32>
    %67 = arith.cmpi ne, %65, %66 : vector<96x128xi32>
    %c0_i32_21 = arith.constant 0 : i32
    %68 = vector.broadcast %c0_i32_21 : i32 to vector<96x128xi32>
    %69 = arith.cmpi slt, %65, %68 : vector<96x128xi32>
    %c0_i32_22 = arith.constant 0 : i32
    %70 = arith.cmpi slt, %63, %c0_i32_22 : i32
    %71 = vector.broadcast %70 : i1 to vector<96x128xi1>
    %72 = vector.broadcast %71 : vector<96x128xi1> to vector<96x128xi1>
    %73 = arith.xori %69, %72 : vector<96x128xi1>
    %74 = arith.andi %73, %67 : vector<96x128xi1>
    %75 = vector.broadcast %63 : i32 to vector<96x128xi32>
    %76 = arith.addi %65, %75 : vector<96x128xi32>
    %77 = arith.select %74, %76, %65 : vector<96x128xi1>, vector<96x128xi32>
    %c0_i32_23 = arith.constant 0 : i32
    %78 = vector.broadcast %c0_i32_23 : i32 to vector<96x128xi32>
    %79 = arith.cmpi ne, %77, %78 : vector<96x128xi32>
    %c1_i32_24 = arith.constant 1 : i32
    %80 = tpu.dynamic_rotate %45 by %c1_i32_24 dim 0 : vector<96x128xf32>, i32 -> vector<96x128xf32>
    %cst_25 = arith.constant 0.000000e+00 : f32
    %81 = vector.broadcast %cst_25 : f32 to vector<96x128xf32>
    %82 = arith.select %79, %80, %81 : vector<96x128xi1>, vector<96x128xf32>
    %c15_i32_26 = arith.constant 15 : i32
    %83 = vector.broadcast %c15_i32_26 : i32 to vector<96x128xi32>
    %84 = arith.cmpi ne, %77, %83 : vector<96x128xi32>
    %c95_i32 = arith.constant 95 : i32
    %85 = tpu.dynamic_rotate %45 by %c95_i32 dim 0 : vector<96x128xf32>, i32 -> vector<96x128xf32>
    %cst_27 = arith.constant 0.000000e+00 : f32
    %86 = vector.broadcast %cst_27 : f32 to vector<96x128xf32>
    %87 = arith.select %84, %85, %86 : vector<96x128xi1>, vector<96x128xf32>
    %88 = tpu.concatenate %82, %45, %87 in 1 : vector<96x128xf32>, vector<96x128xf32>, vector<96x128xf32> -> vector<96x384xf32>
    %89 = tpu.iota {dimensions = array<i32: 0>} : vector<32x128xi32>
    %c16_i32_28 = arith.constant 16 : i32
    %c0_i32_29 = arith.constant 0 : i32
    %90 = arith.cmpi eq, %c16_i32_28, %c0_i32_29 : i32
    %c1_i32_30 = arith.constant 1 : i32
    %91 = arith.select %90, %c1_i32_30, %c16_i32_28 : i32
    %92 = vector.broadcast %91 : i32 to vector<32x128xi32>
    %93 = arith.remsi %89, %92 : vector<32x128xi32>
    %c0_i32_31 = arith.constant 0 : i32
    %94 = vector.broadcast %c0_i32_31 : i32 to vector<32x128xi32>
    %95 = arith.cmpi ne, %93, %94 : vector<32x128xi32>
    %c0_i32_32 = arith.constant 0 : i32
    %96 = vector.broadcast %c0_i32_32 : i32 to vector<32x128xi32>
    %97 = arith.cmpi slt, %93, %96 : vector<32x128xi32>
    %c0_i32_33 = arith.constant 0 : i32
    %98 = arith.cmpi slt, %91, %c0_i32_33 : i32
    %99 = vector.broadcast %98 : i1 to vector<32x128xi1>
    %100 = vector.broadcast %99 : vector<32x128xi1> to vector<32x128xi1>
    %101 = arith.xori %97, %100 : vector<32x128xi1>
    %102 = arith.andi %101, %95 : vector<32x128xi1>
    %103 = vector.broadcast %91 : i32 to vector<32x128xi32>
    %104 = arith.addi %93, %103 : vector<32x128xi32>
    %105 = arith.select %102, %104, %93 : vector<32x128xi1>, vector<32x128xi32>
    %c0_i32_34 = arith.constant 0 : i32
    %106 = vector.broadcast %c0_i32_34 : i32 to vector<32x128xi32>
    %107 = arith.cmpi ne, %105, %106 : vector<32x128xi32>
    %c1_i32_35 = arith.constant 1 : i32
    %108 = tpu.dynamic_rotate %60 by %c1_i32_35 dim 0 : vector<32x128xf32>, i32 -> vector<32x128xf32>
    %cst_36 = arith.constant 0.000000e+00 : f32
    %109 = vector.broadcast %cst_36 : f32 to vector<32x128xf32>
    %110 = arith.select %107, %108, %109 : vector<32x128xi1>, vector<32x128xf32>
    %c15_i32_37 = arith.constant 15 : i32
    %111 = vector.broadcast %c15_i32_37 : i32 to vector<32x128xi32>
    %112 = arith.cmpi ne, %105, %111 : vector<32x128xi32>
    %c31_i32 = arith.constant 31 : i32
    %113 = tpu.dynamic_rotate %60 by %c31_i32 dim 0 : vector<32x128xf32>, i32 -> vector<32x128xf32>
    %cst_38 = arith.constant 0.000000e+00 : f32
    %114 = vector.broadcast %cst_38 : f32 to vector<32x128xf32>
    %115 = arith.select %112, %113, %114 : vector<32x128xi1>, vector<32x128xf32>
    %116 = tpu.concatenate %110, %60, %115 in 1 : vector<32x128xf32>, vector<32x128xf32>, vector<32x128xf32> -> vector<32x384xf32>
    %117 = tpu.concatenate %88, %116 in 0 : vector<96x384xf32>, vector<32x384xf32> -> vector<128x384xf32>
    %c0_39 = arith.constant 0 : index
    %c0_40 = arith.constant 0 : index
    %118 = vector.load %arg4[%c0_39, %c0_40] : memref<384x256xf32, #tpu.memory_space<vmem>>, vector<384x256xf32>
    %cst_41 = arith.constant dense<0.000000e+00> : vector<128x256xf32>
    %119 = tpu.matmul %117, %118, %cst_41 {dimension_numbers = #tpu.dot_dimension_numbers<[1], [0], [0], [1], [0, 0, 1, 1], [], []>} : vector<128x384xf32>, vector<384x256xf32>, vector<128x256xf32> -> vector<128x256xf32>
    %120 = vector.extract_strided_slice %119 {offsets = [0, 0], sizes = [96, 128], strides = [1, 1]} : vector<128x256xf32> to vector<96x128xf32>
    %121 = vector.extract_strided_slice %119 {offsets = [96, 128], sizes = [32, 128], strides = [1, 1]} : vector<128x256xf32> to vector<32x128xf32>
    %c0_42 = arith.constant 0 : index
    %c0_43 = arith.constant 0 : index
    %122 = vector.load %arg5[%c0_42, %c0_43] : memref<1x128xf32, #tpu.memory_space<vmem>>, vector<1x128xf32>
    %123 = vector.broadcast %122 : vector<1x128xf32> to vector<32x128xf32>
    %124 = arith.addf %121, %123 : vector<32x128xf32>
    %c0_44 = arith.constant 0 : index
    %c0_45 = arith.constant 0 : index
    %125 = vector.load %arg7[%c0_44, %c0_45] : memref<32x128xf32, #tpu.memory_space<vmem>>, vector<32x128xf32>
    tpu.vector_store %arg7[%c0_44, %c0_45], %124 {strides = array<i32>} : memref<32x128xf32, #tpu.memory_space<vmem>>, vector<32x128xf32>,
    %c0_46 = arith.constant 0 : index
    %c0_47 = arith.constant 0 : index
    %126 = vector.load %arg6[%c0_46, %c0_47] : memref<1x128xf32, #tpu.memory_space<vmem>>, vector<1x128xf32>
    %127 = vector.broadcast %126 : vector<1x128xf32> to vector<96x128xf32>
    %128 = arith.addf %120, %127 : vector<96x128xf32>
    %c0_48 = arith.constant 0 : index
    %c0_49 = arith.constant 0 : index
    %129 = vector.load %arg8[%c0_48, %c0_49] : memref<96x128xf32, #tpu.memory_space<vmem>>, vector<96x128xf32>
    tpu.vector_store %arg8[%c0_48, %c0_49], %128 {strides = array<i32>} : memref<96x128xf32, #tpu.memory_space<vmem>>, vector<96x128xf32>,
    return
  }
}

</mosaic_0001>

<llo_original>
// kernel: cross_block_forward.1
$region0: #{cross_block_forward.1}
  #allocation0 [shape = 'u32[]', space=smem, size = 0x4, offset = 0x4, fixed_abs, tag = 'smem constant byte address 0x4 - core index']
  #allocation1 [shape = 'u32[72,128]{1,0:T(1,128)}', space=vmem, size = 0x9000, scoped, tag = 'internal scratch']
  %s0 = inlined_call_operand.vmem [shape: f32[128,64], index: 0, kind: input, shape index: {}]
  %s1 = inlined_call_operand.vmem [shape: f32[192,128], index: 1, kind: input, shape index: {}]
  %s2 = inlined_call_operand.vmem [shape: f32[192,128], index: 2, kind: input, shape index: {}]
  %s3 = inlined_call_operand.vmem [shape: f32[1,128], index: 3, kind: input, shape index: {}]
  %s4 = inlined_call_operand.vmem [shape: f32[384,256], index: 4, kind: input, shape index: {}]
  %s5 = inlined_call_operand.vmem [shape: f32[1,128], index: 5, kind: input, shape index: {}]
  %s6 = inlined_call_operand.vmem [shape: f32[1,128], index: 6, kind: input, shape index: {}]
  %s7 = inlined_call_operand.vmem [shape: f32[32,128], index: 7, kind: output, shape index: {0}]
  %s8 = inlined_call_operand.vmem [shape: f32[96,128], index: 8, kind: output, shape index: {1}]
  %9 = xla_tuple %s7, %s8
  %s10 = sld [smem:[#allocation0]]
  $region46: #{cross_block_forward.1} parent=0
    _
  %s12 = ssub.s32 1, %s10
  %s13 = scalar_select 0, %s12, %s10
  // Predicated region
  $region2: #{cross_block_forward.1} parent=0 // pred_check
    _
  $region3: #{cross_block_forward.1} parent=0 // pred_check_branch
    %15 = sbr.rel (0) target = $region5
  $region4: #{cross_block_forward.1} parent=0 // pred_region
    _
  $region5: #{cross_block_forward.1} parent=0 // pred_fallthru
    _
  // Predicated region
  $region6: #{cross_block_forward.1} parent=0 // pred_check
    _
  $region7: #{cross_block_forward.1} parent=0 // pred_check_branch
    %17 = sbr.rel (0) target = $region9
  $region8: #{cross_block_forward.1} parent=0 // pred_region
    _
  $region9: #{cross_block_forward.1} parent=0 // pred_fallthru
    _
  // Predicated region
  $region10: #{cross_block_forward.1} parent=0 // pred_check
    _
  $region11: #{cross_block_forward.1} parent=0 // pred_check_branch
    %19 = sbr.rel (0) target = $region13
  $region12: #{cross_block_forward.1} parent=0 // pred_region
    _
  $region13: #{cross_block_forward.1} parent=0 // pred_fallthru
    _
  // Predicated region
  $region14: #{cross_block_forward.1} parent=0 // pred_check
    _
  $region15: #{cross_block_forward.1} parent=0 // pred_check_branch
    %21 = sbr.rel (0) target = $region17
  $region16: #{cross_block_forward.1} parent=0 // pred_region
    _
  $region17: #{cross_block_forward.1} parent=0 // pred_fallthru
    _
  // Predicated region
  $region18: #{cross_block_forward.1} parent=0 // pred_check
    _
  $region19: #{cross_block_forward.1} parent=0 // pred_check_branch
    %23 = sbr.rel (0) target = $region21
  $region20: #{cross_block_forward.1} parent=0 // pred_region
    _
  $region21: #{cross_block_forward.1} parent=0 // pred_fallthru
    _
  // Predicated region
  $region22: #{cross_block_forward.1} parent=0 // pred_check
    _
  $region23: #{cross_block_forward.1} parent=0 // pred_check_branch
    %25 = sbr.rel (0) target = $region25
  $region24: #{cross_block_forward.1} parent=0 // pred_region
    _
  $region25: #{cross_block_forward.1} parent=0 // pred_fallthru
    _
  // Predicated region
  $region26: #{cross_block_forward.1} parent=0 // pred_check
    _
  $region27: #{cross_block_forward.1} parent=0 // pred_check_branch
    %27 = sbr.rel (0) target = $region29
  $region28: #{cross_block_forward.1} parent=0 // pred_region
    _
  $region29: #{cross_block_forward.1} parent=0 // pred_fallthru
    _
  %v28 = vld [vmem:[%s0] sm:$0xff]
  %v29 = vld [vmem:[%s0 + $0x8] sm:$0xff]
  %v30 = vld [vmem:[%s0 + $0x10] sm:$0xff]
  %v31 = vld [vmem:[%s0 + $0x18] sm:$0xff]
  %v32 = vld [vmem:[%s0 + $0x20] sm:$0xff]
  %v33 = vld [vmem:[%s0 + $0x28] sm:$0xff]
  %v34 = vld [vmem:[%s0 + $0x30] sm:$0xff]
  %v35 = vld [vmem:[%s0 + $0x38] sm:$0xff]
  %v36 = vld [vmem:[%s0 + $0x40] sm:$0xff]
  %v37 = vld [vmem:[%s0 + $0x48] sm:$0xff]
  %v38 = vld [vmem:[%s0 + $0x50] sm:$0xff]
  %v39 = vld [vmem:[%s0 + $0x58] sm:$0xff]
  %v40 = vld [vmem:[%s0 + $0x60] sm:$0xff]
  %v41 = vld [vmem:[%s0 + $0x68] sm:$0xff]
  %v42 = vld [vmem:[%s0 + $0x70] sm:$0xff]
  %v43 = vld [vmem:[%s0 + $0x78] sm:$0xff]
  %v44 = vlaneseq
  %v45 = vshrl.u32 %v44, 7
  %v46 = vadd.s32 %v45, 8
  %v47 = vadd.s32 %v45, 16
  %v48 = vadd.s32 %v45, 24
  %v49 = vadd.s32 %v45, 32
  %v50 = vadd.s32 %v45, 40
  %v51 = vadd.s32 %v45, 48
  %v52 = vadd.s32 %v45, 56
  %v53 = vadd.s32 %v45, 64
  %v54 = vadd.s32 %v45, 72
  %v55 = vadd.s32 %v45, 80
  %v56 = vadd.s32 %v45, 88
  %v57 = vadd.s32 %v45, 96
  %v58 = vadd.s32 %v45, 104
  %v59 = vadd.s32 %v45, 112
  %v60 = vadd.s32 %v45, 120
  %vm61 = vcmp.lt.s32.totalorder %v45, 0
  %v62 = vsub.s32 0, %v45
  %v63 = vsel %vm61, %v62, %v45
  %v64 = vshrl.u32 %v63, 4
  %v65 = vand.u32 %v63, 15
  %v66 = vsub.s32 0, %v65
  %v67 = vsel %vm61, %v66, %v65
  %vm68 = vcmp.lt.s32.totalorder %v46, 0
  %v69 = vsub.s32 0, %v46
  %v70 = vsel %vm68, %v69, %v46
  %v71 = vshrl.u32 %v70, 4
  %v72 = vand.u32 %v70, 15
  %v73 = vsub.s32 0, %v72
  %v74 = vsel %vm68, %v73, %v72
  %vm75 = vcmp.lt.s32.totalorder %v47, 0
  %v76 = vsub.s32 0, %v47
  %v77 = vsel %vm75, %v76, %v47
  %v78 = vshrl.u32 %v77, 4
  %v79 = vand.u32 %v77, 15
  %v80 = vsub.s32 0, %v79
  %v81 = vsel %vm75, %v80, %v79
  %vm82 = vcmp.lt.s32.totalorder %v48, 0
  %v83 = vsub.s32 0, %v48
  %v84 = vsel %vm82, %v83, %v48
  %v85 = vshrl.u32 %v84, 4
  %v86 = vand.u32 %v84, 15
  %v87 = vsub.s32 0, %v86
  %v88 = vsel %vm82, %v87, %v86
  %vm89 = vcmp.lt.s32.totalorder %v49, 0
  %v90 = vsub.s32 0, %v49
  %v91 = vsel %vm89, %v90, %v49
  %v92 = vshrl.u32 %v91, 4
  %v93 = vand.u32 %v91, 15
  %v94 = vsub.s32 0, %v93
  %v95 = vsel %vm89, %v94, %v93
  %vm96 = vcmp.lt.s32.totalorder %v50, 0
  %v97 = vsub.s32 0, %v50
  %v98 = vsel %vm96, %v97, %v50
  %v99 = vshrl.u32 %v98, 4
  %v100 = vand.u32 %v98, 15
  %v101 = vsub.s32 0, %v100
  %v102 = vsel %vm96, %v101, %v100
  %vm103 = vcmp.lt.s32.totalorder %v51, 0
  %v104 = vsub.s32 0, %v51
  %v105 = vsel %vm103, %v104, %v51
  %v106 = vshrl.u32 %v105, 4
  %v107 = vand.u32 %v105, 15
  %v108 = vsub.s32 0, %v107
  %v109 = vsel %vm103, %v108, %v107
  %vm110 = vcmp.lt.s32.totalorder %v52, 0
  %v111 = vsub.s32 0, %v52
  %v112 = vsel %vm110, %v111, %v52
  %v113 = vshrl.u32 %v112, 4
  %v114 = vand.u32 %v112, 15
  %v115 = vsub.s32 0, %v114
  %v116 = vsel %vm110, %v115, %v114
  %vm117 = vcmp.lt.s32.totalorder %v53, 0
  %v118 = vsub.s32 0, %v53
  %v119 = vsel %vm117, %v118, %v53
  %v120 = vshrl.u32 %v119, 4
  %v121 = vand.u32 %v119, 15
  %v122 = vsub.s32 0, %v121
  %v123 = vsel %vm117, %v122, %v121
  %vm124 = vcmp.lt.s32.totalorder %v54, 0
  %v125 = vsub.s32 0, %v54
  %v126 = vsel %vm124, %v125, %v54
  %v127 = vshrl.u32 %v126, 4
  %v128 = vand.u32 %v126, 15
  %v129 = vsub.s32 0, %v128
  %v130 = vsel %vm124, %v129, %v128
  %vm131 = vcmp.lt.s32.totalorder %v55, 0
  %v132 = vsub.s32 0, %v55
  %v133 = vsel %vm131, %v132, %v55
  %v134 = vshrl.u32 %v133, 4
  %v135 = vand.u32 %v133, 15
  %v136 = vsub.s32 0, %v135
  %v137 = vsel %vm131, %v136, %v135
  %vm138 = vcmp.lt.s32.totalorder %v56, 0
  %v139 = vsub.s32 0, %v56
  %v140 = vsel %vm138, %v139, %v56
  %v141 = vshrl.u32 %v140, 4
  %v142 = vand.u32 %v140, 15
  %v143 = vsub.s32 0, %v142
  %v144 = vsel %vm138, %v143, %v142
  %vm145 = vcmp.lt.s32.totalorder %v57, 0
  %v146 = vsub.s32 0, %v57
  %v147 = vsel %vm145, %v146, %v57
  %v148 = vshrl.u32 %v147, 4
  %v149 = vand.u32 %v147, 15
  %v150 = vsub.s32 0, %v149
  %v151 = vsel %vm145, %v150, %v149
  %vm152 = vcmp.lt.s32.totalorder %v58, 0
  %v153 = vsub.s32 0, %v58
  %v154 = vsel %vm152, %v153, %v58
  %v155 = vshrl.u32 %v154, 4
  %v156 = vand.u32 %v154, 15
  %v157 = vsub.s32 0, %v156
  %v158 = vsel %vm152, %v157, %v156
  %vm159 = vcmp.lt.s32.totalorder %v59, 0
  %v160 = vsub.s32 0, %v59
  %v161 = vsel %vm159, %v160, %v59
  %v162 = vshrl.u32 %v161, 4
  %v163 = vand.u32 %v161, 15
  %v164 = vsub.s32 0, %v163
  %v165 = vsel %vm159, %v164, %v163
  %vm166 = vcmp.lt.s32.totalorder %v60, 0
  %v167 = vsub.s32 0, %v60
  %v168 = vsel %vm166, %v167, %v60
  %v169 = vshrl.u32 %v168, 4
  %v170 = vand.u32 %v168, 15
  %v171 = vsub.s32 0, %v170
  %v172 = vsel %vm166, %v171, %v170
  %vm173 = vcmp.ne.s32.totalorder %v67, 0
  %vm174 = vcmp.ne.s32.totalorder %v74, 0
  %vm175 = vcmp.ne.s32.totalorder %v81, 0
  %vm176 = vcmp.ne.s32.totalorder %v88, 0
  %vm177 = vcmp.ne.s32.totalorder %v95, 0
  %vm178 = vcmp.ne.s32.totalorder %v102, 0
  %vm179 = vcmp.ne.s32.totalorder %v109, 0
  %vm180 = vcmp.ne.s32.totalorder %v116, 0
  %vm181 = vcmp.ne.s32.totalorder %v123, 0
  %vm182 = vcmp.ne.s32.totalorder %v130, 0
  %vm183 = vcmp.ne.s32.totalorder %v137, 0
  %vm184 = vcmp.ne.s32.totalorder %v144, 0
  %vm185 = vcmp.ne.s32.totalorder %v151, 0
  %vm186 = vcmp.ne.s32.totalorder %v158, 0
  %vm187 = vcmp.ne.s32.totalorder %v165, 0
  %vm188 = vcmp.ne.s32.totalorder %v172, 0
  %vm189 = vcmp.lt.s32.totalorder %v67, 0
  %vm190 = vcmp.lt.s32.totalorder %v74, 0
  %vm191 = vcmp.lt.s32.totalorder %v81, 0
  %vm192 = vcmp.lt.s32.totalorder %v88, 0
  %vm193 = vcmp.lt.s32.totalorder %v95, 0
  %vm194 = vcmp.lt.s32.totalorder %v102, 0
  %vm195 = vcmp.lt.s32.totalorder %v109, 0
  %vm196 = vcmp.lt.s32.totalorder %v116, 0
  %vm197 = vcmp.lt.s32.totalorder %v123, 0
  %vm198 = vcmp.lt.s32.totalorder %v130, 0
  %vm199 = vcmp.lt.s32.totalorder %v137, 0
  %vm200 = vcmp.lt.s32.totalorder %v144, 0
  %vm201 = vcmp.lt.s32.totalorder %v151, 0
  %vm202 = vcmp.lt.s32.totalorder %v158, 0
  %vm203 = vcmp.lt.s32.totalorder %v165, 0
  %vm204 = vcmp.lt.s32.totalorder %v172, 0
  %vm205 = vmand %vm189, %vm173
  %vm206 = vmand %vm190, %vm174
  %vm207 = vmand %vm191, %vm175
  %vm208 = vmand %vm192, %vm176
  %vm209 = vmand %vm193, %vm177
  %vm210 = vmand %vm194, %vm178
  %vm211 = vmand %vm195, %vm179
  %vm212 = vmand %vm196, %vm180
  %vm213 = vmand %vm197, %vm181
  %vm214 = vmand %vm198, %vm182
  %vm215 = vmand %vm199, %vm183
  %vm216 = vmand %vm200, %vm184
  %vm217 = vmand %vm201, %vm185
  %vm218 = vmand %vm202, %vm186
  %vm219 = vmand %vm203, %vm187
  %vm220 = vmand %vm204, %vm188
  %v221 = vadd.s32 %v67, 16
  %v222 = vadd.s32 %v74, 16
  %v223 = vadd.s32 %v81, 16
  %v224 = vadd.s32 %v88, 16
  %v225 = vadd.s32 %v95, 16
  %v226 = vadd.s32 %v102, 16
  %v227 = vadd.s32 %v109, 16
  %v228 = vadd.s32 %v116, 16
  %v229 = vadd.s32 %v123, 16
  %v230 = vadd.s32 %v130, 16
  %v231 = vadd.s32 %v137, 16
  %v232 = vadd.s32 %v144, 16
  %v233 = vadd.s32 %v151, 16
  %v234 = vadd.s32 %v158, 16
  %v235 = vadd.s32 %v165, 16
  %v236 = vadd.s32 %v172, 16
  %v237 = vsel %vm205, %v221, %v67
  %v238 = vsel %vm206, %v222, %v74
  %v239 = vsel %vm207, %v223, %v81
  %v240 = vsel %vm208, %v224, %v88
  %v241 = vsel %vm209, %v225, %v95
  %v242 = vsel %vm210, %v226, %v102
  %v243 = vsel %vm211, %v227, %v109
  %v244 = vsel %vm212, %v228, %v116
  %v245 = vsel %vm213, %v229, %v123
  %v246 = vsel %vm214, %v230, %v130
  %v247 = vsel %vm215, %v231, %v137
  %v248 = vsel %vm216, %v232, %v144
  %v249 = vsel %vm217, %v233, %v151
  %v250 = vsel %vm218, %v234, %v158
  %v251 = vsel %vm219, %v235, %v165
  %v252 = vsel %vm220, %v236, %v172
  %vm253 = vcmp.ne.s32.totalorder %v237, 0
  %vm254 = vcmp.ne.s32.totalorder %v238, 0
  %vm255 = vcmp.ne.s32.totalorder %v239, 0
  %vm256 = vcmp.ne.s32.totalorder %v240, 0
  %vm257 = vcmp.ne.s32.totalorder %v241, 0
  %vm258 = vcmp.ne.s32.totalorder %v242, 0
  %vm259 = vcmp.ne.s32.totalorder %v243, 0
  %vm260 = vcmp.ne.s32.totalorder %v244, 0
  %vm261 = vcmp.ne.s32.totalorder %v245, 0
  %vm262 = vcmp.ne.s32.totalorder %v246, 0
  %vm263 = vcmp.ne.s32.totalorder %v247, 0
  %vm264 = vcmp.ne.s32.totalorder %v248, 0
  %vm265 = vcmp.ne.s32.totalorder %v249, 0
  %vm266 = vcmp.ne.s32.totalorder %v250, 0
  %vm267 = vcmp.ne.s32.totalorder %v251, 0
  %vm268 = vcmp.ne.s32.totalorder %v252, 0
  %v269 = vrot.slane %v28, 7
  %v270 = vrot.slane %v29, 7
  %v271 = vrot.slane %v30, 7
  %v272 = vrot.slane %v31, 7
  %v273 = vrot.slane %v32, 7
  %v274 = vrot.slane %v33, 7
  %v275 = vrot.slane %v34, 7
  %v276 = vrot.slane %v35, 7
  %v277 = vrot.slane %v36, 7
  %v278 = vrot.slane %v37, 7
  %v279 = vrot.slane %v38, 7
  %v280 = vrot.slane %v39, 7
  %v281 = vrot.slane %v40, 7
  %v282 = vrot.slane %v41, 7
  %v283 = vrot.slane %v42, 7
  %v284 = vrot.slane %v43, 7
  %vm285 = vcmp.lt.s32.totalorder %v45, 1
  %v286 = vsel %vm285, %v283, %v284
  %v287 = vsel %vm285, %v282, %v283
  %v288 = vsel %vm285, %v281, %v282
  %v289 = vsel %vm285, %v280, %v281
  %v290 = vsel %vm285, %v279, %v280
  %v291 = vsel %vm285, %v278, %v279
  %v292 = vsel %vm285, %v277, %v278
  %v293 = vsel %vm285, %v276, %v277
  %v294 = vsel %vm285, %v275, %v276
  %v295 = vsel %vm285, %v274, %v275
  %v296 = vsel %vm285, %v273, %v274
  %v297 = vsel %vm285, %v272, %v273
  %v298 = vsel %vm285, %v271, %v272
  %v299 = vsel %vm285, %v270, %v271
  %v300 = vsel %vm285, %v269, %v270
  %v301 = vsel %vm285, %v284, %v269
  %v302 = vsel %vm253, %v301, 0.0
  %v303 = vsel %vm254, %v300, 0.0
  %v304 = vsel %vm255, %v299, 0.0
  %v305 = vsel %vm256, %v298, 0.0
  %v306 = vsel %vm257, %v297, 0.0
  %v307 = vsel %vm258, %v296, 0.0
  %v308 = vsel %vm259, %v295, 0.0
  %v309 = vsel %vm260, %v294, 0.0
  %v310 = vsel %vm261, %v293, 0.0
  %v311 = vsel %vm262, %v292, 0.0
  %v312 = vsel %vm263, %v291, 0.0
  %v313 = vsel %vm264, %v290, 0.0
  %v314 = vsel %vm265, %v289, 0.0
  %v315 = vsel %vm266, %v288, 0.0
  %v316 = vsel %vm267, %v287, 0.0
  %v317 = vsel %vm268, %v286, 0.0
  %vm318 = vcmp.ne.s32.totalorder %v237, 15
  %vm319 = vcmp.ne.s32.totalorder %v238, 15
  %vm320 = vcmp.ne.s32.totalorder %v239, 15
  %vm321 = vcmp.ne.s32.totalorder %v240, 15
  %vm322 = vcmp.ne.s32.totalorder %v241, 15
  %vm323 = vcmp.ne.s32.totalorder %v242, 15
  %vm324 = vcmp.ne.s32.totalorder %v243, 15
  %vm325 = vcmp.ne.s32.totalorder %v244, 15
  %vm326 = vcmp.ne.s32.totalorder %v245, 15
  %vm327 = vcmp.ne.s32.totalorder %v246, 15
  %vm328 = vcmp.ne.s32.totalorder %v247, 15
  %vm329 = vcmp.ne.s32.totalorder %v248, 15
  %vm330 = vcmp.ne.s32.totalorder %v249, 15
  %vm331 = vcmp.ne.s32.totalorder %v250, 15
  %vm332 = vcmp.ne.s32.totalorder %v251, 15
  %vm333 = vcmp.ne.s32.totalorder %v252, 15
  %v334 = vrot.slane %v28, 1
  %v335 = vrot.slane %v29, 1
  %v336 = vrot.slane %v30, 1
  %v337 = vrot.slane %v31, 1
  %v338 = vrot.slane %v32, 1
  %v339 = vrot.slane %v33, 1
  %v340 = vrot.slane %v34, 1
  %v341 = vrot.slane %v35, 1
  %v342 = vrot.slane %v36, 1
  %v343 = vrot.slane %v37, 1
  %v344 = vrot.slane %v38, 1
  %v345 = vrot.slane %v39, 1
  %v346 = vrot.slane %v40, 1
  %v347 = vrot.slane %v41, 1
  %v348 = vrot.slane %v42, 1
  %v349 = vrot.slane %v43, 1
  %vm350 = vcmp.lt.s32.totalorder %v45, 7
  %v351 = vsel %vm350, %v348, %v349
  %v352 = vsel %vm350, %v347, %v348
  %v353 = vsel %vm350, %v346, %v347
  %v354 = vsel %vm350, %v345, %v346
  %v355 = vsel %vm350, %v344, %v345
  %v356 = vsel %vm350, %v343, %v344
  %v357 = vsel %vm350, %v342, %v343
  %v358 = vsel %vm350, %v341, %v342
  %v359 = vsel %vm350, %v340, %v341
  %v360 = vsel %vm350, %v339, %v340
  %v361 = vsel %vm350, %v338, %v339
  %v362 = vsel %vm350, %v337, %v338
  %v363 = vsel %vm350, %v336, %v337
  %v364 = vsel %vm350, %v335, %v336
  %v365 = vsel %vm350, %v334, %v335
  %v366 = vsel %vm350, %v349, %v334
  %v367 = vsel %vm318, %v365, 0.0
  %v368 = vsel %vm319, %v364, 0.0
  %v369 = vsel %vm320, %v363, 0.0
  %v370 = vsel %vm321, %v362, 0.0
  %v371 = vsel %vm322, %v361, 0.0
  %v372 = vsel %vm323, %v360, 0.0
  %v373 = vsel %vm324, %v359, 0.0
  %v374 = vsel %vm325, %v358, 0.0
  %v375 = vsel %vm326, %v357, 0.0
  %v376 = vsel %vm327, %v356, 0.0
  %v377 = vsel %vm328, %v355, 0.0
  %v378 = vsel %vm329, %v354, 0.0
  %v379 = vsel %vm330, %v353, 0.0
  %v380 = vsel %vm331, %v352, 0.0
  %v381 = vsel %vm332, %v351, 0.0
  %v382 = vsel %vm333, %v366, 0.0
  %399 = vrot.lane.b32.xlu0 %v28, 64
  %v400 = vpop.permute.xlu0 %399
  %401 = vrot.lane.b32.xlu0 %v29, 64
  %v402 = vpop.permute.xlu0 %401
  %403 = vrot.lane.b32.xlu0 %v30, 64
  %v404 = vpop.permute.xlu0 %403
  %405 = vrot.lane.b32.xlu0 %v31, 64
  %v406 = vpop.permute.xlu0 %405
  %407 = vrot.lane.b32.xlu0 %v32, 64
  %v408 = vpop.permute.xlu0 %407
  %409 = vrot.lane.b32.xlu0 %v33, 64
  %v410 = vpop.permute.xlu0 %409
  %411 = vrot.lane.b32.xlu0 %v34, 64
  %v412 = vpop.permute.xlu0 %411
  %413 = vrot.lane.b32.xlu0 %v35, 64
  %v414 = vpop.permute.xlu0 %413
  %415 = vrot.lane.b32.xlu0 %v36, 64
  %v416 = vpop.permute.xlu0 %415
  %417 = vrot.lane.b32.xlu0 %v37, 64
  %v418 = vpop.permute.xlu0 %417
  %419 = vrot.lane.b32.xlu0 %v38, 64
  %v420 = vpop.permute.xlu0 %419
  %421 = vrot.lane.b32.xlu0 %v39, 64
  %v422 = vpop.permute.xlu0 %421
  %423 = vrot.lane.b32.xlu0 %v40, 64
  %v424 = vpop.permute.xlu0 %423
  %425 = vrot.lane.b32.xlu0 %v41, 64
  %v426 = vpop.permute.xlu0 %425
  %427 = vrot.lane.b32.xlu0 %v42, 64
  %v428 = vpop.permute.xlu0 %427
  %429 = vrot.lane.b32.xlu0 %v43, 64
  %v430 = vpop.permute.xlu0 %429
  %vm447 = vcmask 523264
  %v448 = vsel %vm447, %v302, %v400
  %v449 = vsel %vm447, %v303, %v402
  %v450 = vsel %vm447, %v304, %v404
  %v451 = vsel %vm447, %v305, %v406
  %v452 = vsel %vm447, %v306, %v408
  %v453 = vsel %vm447, %v307, %v410
  %v454 = vsel %vm447, %v308, %v412
  %v455 = vsel %vm447, %v309, %v414
  %v456 = vsel %vm447, %v310, %v416
  %v457 = vsel %vm447, %v311, %v418
  %v458 = vsel %vm447, %v312, %v420
  %v459 = vsel %vm447, %v313, %v422
  %v460 = vsel %vm447, %v314, %v424
  %v461 = vsel %vm447, %v315, %v426
  %v462 = vsel %vm447, %v316, %v428
  %v463 = vsel %vm447, %v317, %v430
  %v464 = vld [vmem:[%s1] sm:$0xff]
  %v465 = vld [vmem:[%s1 + $0x8] sm:$0xff]
  %v466 = vld [vmem:[%s1 + $0x10] sm:$0xff]
  %v467 = vld [vmem:[%s1 + $0x18] sm:$0xff]
  %v468 = vld [vmem:[%s1 + $0x20] sm:$0xff]
  %v469 = vld [vmem:[%s1 + $0x28] sm:$0xff]
  %v470 = vld [vmem:[%s1 + $0x30] sm:$0xff]
  %v471 = vld [vmem:[%s1 + $0x38] sm:$0xff]
  %v472 = vld [vmem:[%s1 + $0x40] sm:$0xff]
  %v473 = vld [vmem:[%s1 + $0x48] sm:$0xff]
  %v474 = vld [vmem:[%s1 + $0x50] sm:$0xff]
  %v475 = vld [vmem:[%s1 + $0x58] sm:$0xff]
  %v476 = vld [vmem:[%s1 + $0x60] sm:$0xff]
  %v477 = vld [vmem:[%s1 + $0x68] sm:$0xff]
  %v478 = vld [vmem:[%s1 + $0x70] sm:$0xff]
  %v479 = vld [vmem:[%s1 + $0x78] sm:$0xff]
  %v480 = vld [vmem:[%s1 + $0x80] sm:$0xff]
  %v481 = vld [vmem:[%s1 + $0x88] sm:$0xff]
  %v482 = vld [vmem:[%s1 + $0x90] sm:$0xff]
  %v483 = vld [vmem:[%s1 + $0x98] sm:$0xff]
  %v484 = vld [vmem:[%s1 + $0xa0] sm:$0xff]
  %v485 = vld [vmem:[%s1 + $0xa8] sm:$0xff]
  %v486 = vld [vmem:[%s1 + $0xb0] sm:$0xff]
  %v487 = vld [vmem:[%s1 + $0xb8] sm:$0xff]
  %v489 = vsel %vm447, %v367, 0
  %v492 = vsel %vm447, %v368, 0
  %v495 = vsel %vm447, %v369, 0
  %v498 = vsel %vm447, %v370, 0
  %500 = vmatpush.msra.mxu0 %v479
  %501 = vmatpush.msra.mxu0 %v478
  %502 = vmatpush.msra.mxu0 %v477
  %503 = vmatpush.msra.mxu0 %v476
  %504 = vmatpush.msra.mxu0 %v475
  %505 = vmatpush.msra.mxu0 %v474
  %506 = vmatpush.msra.mxu0 %v473
  %507 = vmatpush.msra.mxu0 %v472
  %508 = vmatpush.msra.mxu0 %v471
  %509 = vmatpush.msra.mxu0 %v470
  %510 = vmatpush.msra.mxu0 %v469
  %511 = vmatpush.msra.mxu0 %v468
  %512 = vmatpush.msra.mxu0 %v467
  %513 = vmatpush.msra.mxu0 %v466
  %514 = vmatpush.msra.mxu0 %v465
  %515 = vmatpush.msra.mxu0 %v464
  %516 = vmatmul.f32.gmra.mxu0 %v448
  %v517 = vpop.f32.mrf.mxu0
  %v518 = vadd.f32 0.0, %v517
  %519 = vmatmul.f32.gmra.mxu0 %v449
  %v520 = vpop.f32.mrf.mxu0
  %v521 = vadd.f32 0.0, %v520
  %522 = vmatmul.f32.gmra.mxu0 %v450
  %v523 = vpop.f32.mrf.mxu0
  %v524 = vadd.f32 0.0, %v523
  %525 = vmatmul.f32.gmra.mxu0 %v451
  %v526 = vpop.f32.mrf.mxu0
  %v527 = vadd.f32 0.0, %v526
  %528 = vdwg.mxu0
  %529 = vmatpush.msra.mxu0 0.0
  %530 = vmatpush.msra.mxu0 0.0
  %531 = vmatpush.msra.mxu0 0.0
  %532 = vmatpush.msra.mxu0 0.0
  %533 = vmatpush.msra.mxu0 0.0
  %534 = vmatpush.msra.mxu0 0.0
  %535 = vmatpush.msra.mxu0 0.0
  %536 = vmatpush.msra.mxu0 0.0
  %537 = vmatpush.msra.mxu0 %v487
  %538 = vmatpush.msra.mxu0 %v486
  %539 = vmatpush.msra.mxu0 %v485
  %540 = vmatpush.msra.mxu0 %v484
  %541 = vmatpush.msra.mxu0 %v483
  %542 = vmatpush.msra.mxu0 %v482
  %543 = vmatpush.msra.mxu0 %v481
  %544 = vmatpush.msra.mxu0 %v480
  %545 = vmatmul.f32.gmra.mxu0 %v489
  %v546 = vpop.f32.mrf.mxu0
  %v547 = vadd.f32 %v518, %v546
  %548 = vmatmul.f32.gmra.mxu0 %v492
  %v549 = vpop.f32.mrf.mxu0
  %v550 = vadd.f32 %v521, %v549
  %551 = vmatmul.f32.gmra.mxu0 %v495
  %v552 = vpop.f32.mrf.mxu0
  %v553 = vadd.f32 %v524, %v552
  %554 = vmatmul.f32.gmra.mxu0 %v498
  %v555 = vpop.f32.mrf.mxu0
  %v556 = vadd.f32 %v527, %v555
  %557 = vdwg.mxu0
  %v558 = vld [vmem:[%s2] sm:$0xff]
  %v559 = vld [vmem:[%s2 + $0x8] sm:$0xff]
  %v560 = vld [vmem:[%s2 + $0x10] sm:$0xff]
  %v561 = vld [vmem:[%s2 + $0x18] sm:$0xff]
  %v562 = vld [vmem:[%s2 + $0x20] sm:$0xff]
  %v563 = vld [vmem:[%s2 + $0x28] sm:$0xff]
  %v564 = vld [vmem:[%s2 + $0x30] sm:$0xff]
  %v565 = vld [vmem:[%s2 + $0x38] sm:$0xff]
  %v566 = vld [vmem:[%s2 + $0x40] sm:$0xff]
  %v567 = vld [vmem:[%s2 + $0x48] sm:$0xff]
  %v568 = vld [vmem:[%s2 + $0x50] sm:$0xff]
  %v569 = vld [vmem:[%s2 + $0x58] sm:$0xff]
  %v570 = vld [vmem:[%s2 + $0x60] sm:$0xff]
  %v571 = vld [vmem:[%s2 + $0x68] sm:$0xff]
  %v572 = vld [vmem:[%s2 + $0x70] sm:$0xff]
  %v573 = vld [vmem:[%s2 + $0x78] sm:$0xff]
  %v574 = vld [vmem:[%s2 + $0x80] sm:$0xff]
  %v575 = vld [vmem:[%s2 + $0x88] sm:$0xff]
  %v576 = vld [vmem:[%s2 + $0x90] sm:$0xff]
  %v577 = vld [vmem:[%s2 + $0x98] sm:$0xff]
  %v578 = vld [vmem:[%s2 + $0xa0] sm:$0xff]
  %v579 = vld [vmem:[%s2 + $0xa8] sm:$0xff]
  %v580 = vld [vmem:[%s2 + $0xb0] sm:$0xff]
  %v581 = vld [vmem:[%s2 + $0xb8] sm:$0xff]
  %v583 = vsel %vm447, %v371, 0
  %v586 = vsel %vm447, %v372, 0
  %v589 = vsel %vm447, %v373, 0
  %v592 = vsel %vm447, %v374, 0
  %v595 = vsel %vm447, %v375, 0
  %v598 = vsel %vm447, %v376, 0
  %v601 = vsel %vm447, %v377, 0
  %v604 = vsel %vm447, %v378, 0
  %v607 = vsel %vm447, %v379, 0
  %v610 = vsel %vm447, %v380, 0
  %v613 = vsel %vm447, %v381, 0
  %v616 = vsel %vm447, %v382, 0
  %618 = vmatpush.msra.mxu0 %v573
  %619 = vmatpush.msra.mxu0 %v572
  %620 = vmatpush.msra.mxu0 %v571
  %621 = vmatpush.msra.mxu0 %v570
  %622 = vmatpush.msra.mxu0 %v569
  %623 = vmatpush.msra.mxu0 %v568
  %624 = vmatpush.msra.mxu0 %v567
  %625 = vmatpush.msra.mxu0 %v566
  %626 = vmatpush.msra.mxu0 %v565
  %627 = vmatpush.msra.mxu0 %v564
  %628 = vmatpush.msra.mxu0 %v563
  %629 = vmatpush.msra.mxu0 %v562
  %630 = vmatpush.msra.mxu0 %v561
  %631 = vmatpush.msra.mxu0 %v560
  %632 = vmatpush.msra.mxu0 %v559
  %633 = vmatpush.msra.mxu0 %v558
  %634 = vmatmul.f32.gmra.mxu0 %v452
  %v635 = vpop.f32.mrf.mxu0
  %v636 = vadd.f32 %v547, %v635
  %637 = vmatmul.f32.gmra.mxu0 %v453
  %v638 = vpop.f32.mrf.mxu0
  %v639 = vadd.f32 %v550, %v638
  %640 = vmatmul.f32.gmra.mxu0 %v454
  %v641 = vpop.f32.mrf.mxu0
  %v642 = vadd.f32 %v547, %v641
  %643 = vmatmul.f32.gmra.mxu0 %v455
  %v644 = vpop.f32.mrf.mxu0
  %v645 = vadd.f32 %v550, %v644
  %646 = vmatmul.f32.gmra.mxu0 %v456
  %v647 = vpop.f32.mrf.mxu0
  %v648 = vadd.f32 %v547, %v647
  %649 = vmatmul.f32.gmra.mxu0 %v457
  %v650 = vpop.f32.mrf.mxu0
  %v651 = vadd.f32 %v550, %v650
  %652 = vmatmul.f32.gmra.mxu0 %v458
  %v653 = vpop.f32.mrf.mxu0
  %v654 = vadd.f32 %v553, %v653
  %655 = vmatmul.f32.gmra.mxu0 %v459
  %v656 = vpop.f32.mrf.mxu0
  %v657 = vadd.f32 %v556, %v656
  %658 = vmatmul.f32.gmra.mxu0 %v460
  %v659 = vpop.f32.mrf.mxu0
  %v660 = vadd.f32 %v553, %v659
  %661 = vmatmul.f32.gmra.mxu0 %v461
  %v662 = vpop.f32.mrf.mxu0
  %v663 = vadd.f32 %v556, %v662
  %664 = vmatmul.f32.gmra.mxu0 %v462
  %v665 = vpop.f32.mrf.mxu0
  %v666 = vadd.f32 %v553, %v665
  %667 = vmatmul.f32.gmra.mxu0 %v463
  %v668 = vpop.f32.mrf.mxu0
  %v669 = vadd.f32 %v556, %v668
  %670 = vdwg.mxu0
  %671 = vmatpush.msra.mxu0 0.0
  %672 = vmatpush.msra.mxu0 0.0
  %673 = vmatpush.msra.mxu0 0.0
  %674 = vmatpush.msra.mxu0 0.0
  %675 = vmatpush.msra.mxu0 0.0
  %676 = vmatpush.msra.mxu0 0.0
  %677 = vmatpush.msra.mxu0 0.0
  %678 = vmatpush.msra.mxu0 0.0
  %679 = vmatpush.msra.mxu0 %v581
  %680 = vmatpush.msra.mxu0 %v580
  %681 = vmatpush.msra.mxu0 %v579
  %682 = vmatpush.msra.mxu0 %v578
  %683 = vmatpush.msra.mxu0 %v577
  %684 = vmatpush.msra.mxu0 %v576
  %685 = vmatpush.msra.mxu0 %v575
  %686 = vmatpush.msra.mxu0 %v574
  %687 = vmatmul.f32.gmra.mxu0 %v583
  %v688 = vpop.f32.mrf.mxu0
  %v689 = vadd.f32 %v636, %v688
  %690 = vmatmul.f32.gmra.mxu0 %v586
  %v691 = vpop.f32.mrf.mxu0
  %v692 = vadd.f32 %v639, %v691
  %693 = vmatmul.f32.gmra.mxu0 %v589
  %v694 = vpop.f32.mrf.mxu0
  %v695 = vadd.f32 %v642, %v694
  %696 = vmatmul.f32.gmra.mxu0 %v592
  %v697 = vpop.f32.mrf.mxu0
  %v698 = vadd.f32 %v645, %v697
  %699 = vmatmul.f32.gmra.mxu0 %v595
  %v700 = vpop.f32.mrf.mxu0
  %v701 = vadd.f32 %v648, %v700
  %702 = vmatmul.f32.gmra.mxu0 %v598
  %v703 = vpop.f32.mrf.mxu0
  %v704 = vadd.f32 %v651, %v703
  %705 = vmatmul.f32.gmra.mxu0 %v601
  %v706 = vpop.f32.mrf.mxu0
  %v707 = vadd.f32 %v654, %v706
  %708 = vmatmul.f32.gmra.mxu0 %v604
  %v709 = vpop.f32.mrf.mxu0
  %v710 = vadd.f32 %v657, %v709
  %711 = vmatmul.f32.gmra.mxu0 %v607
  %v712 = vpop.f32.mrf.mxu0
  %v713 = vadd.f32 %v660, %v712
  %714 = vmatmul.f32.gmra.mxu0 %v610
  %v715 = vpop.f32.mrf.mxu0
  %v716 = vadd.f32 %v663, %v715
  %717 = vmatmul.f32.gmra.mxu0 %v613
  %v718 = vpop.f32.mrf.mxu0
  %v719 = vadd.f32 %v666, %v718
  %720 = vmatmul.f32.gmra.mxu0 %v616
  %v721 = vpop.f32.mrf.mxu0
  %v722 = vadd.f32 %v669, %v721
  %723 = vdwg.mxu0
  %v724 = vld [vmem:[%s3] sm:$0x1]
  %v726 = vperm.slane %v724, 0
  %v728 = vadd.f32 %v689, %v726
  %v729 = vadd.f32 %v692, %v726
  %v730 = vadd.f32 %v695, %v726
  %v731 = vadd.f32 %v698, %v726
  %v732 = vadd.f32 %v701, %v726
  %v733 = vadd.f32 %v704, %v726
  %v734 = vadd.f32 %v707, %v726
  %v735 = vadd.f32 %v710, %v726
  %v736 = vadd.f32 %v713, %v726
  %v737 = vadd.f32 %v716, %v726
  %v738 = vadd.f32 %v719, %v726
  %v739 = vadd.f32 %v722, %v726
  %v740 = vadd.f32 %v728, %v730
  %v741 = vadd.f32 %v729, %v731
  %v742 = vadd.f32 %v740, %v732
  %v743 = vadd.f32 %v741, %v733
  %v744 = vmul.f32 %v742, 0.33333334
  %v745 = vmul.f32 %v743, 0.33333334
  %v746 = vadd.f32 %v734, %v736
  %v747 = vadd.f32 %v735, %v737
  %v748 = vadd.f32 %v746, %v738
  %v749 = vadd.f32 %v747, %v739
  %v750 = vmul.f32 %v748, 0.33333334
  %v751 = vmul.f32 %v749, 0.33333334
  %v752 = vrot.slane %v728, 7
  %v753 = vrot.slane %v729, 7
  %v754 = vrot.slane %v730, 7
  %v755 = vrot.slane %v731, 7
  %v756 = vrot.slane %v732, 7
  %v757 = vrot.slane %v733, 7
  %v758 = vrot.slane %v734, 7
  %v759 = vrot.slane %v735, 7
  %v760 = vrot.slane %v736, 7
  %v761 = vrot.slane %v737, 7
  %v762 = vrot.slane %v738, 7
  %v763 = vrot.slane %v739, 7
  %v764 = vsel %vm285, %v762, %v763
  %v765 = vsel %vm285, %v761, %v762
  %v766 = vsel %vm285, %v760, %v761
  %v767 = vsel %vm285, %v759, %v760
  %v768 = vsel %vm285, %v758, %v759
  %v769 = vsel %vm285, %v757, %v758
  %v770 = vsel %vm285, %v756, %v757
  %v771 = vsel %vm285, %v755, %v756
  %v772 = vsel %vm285, %v754, %v755
  %v773 = vsel %vm285, %v753, %v754
  %v774 = vsel %vm285, %v752, %v753
  %v775 = vsel %vm285, %v763, %v752
  %v776 = vsel %vm253, %v775, 0.0
  %v777 = vsel %vm254, %v774, 0.0
  %v778 = vsel %vm255, %v773, 0.0
  %v779 = vsel %vm256, %v772, 0.0
  %v780 = vsel %vm257, %v771, 0.0
  %v781 = vsel %vm258, %v770, 0.0
  %v782 = vsel %vm259, %v769, 0.0
  %v783 = vsel %vm260, %v768, 0.0
  %v784 = vsel %vm261, %v767, 0.0
  %v785 = vsel %vm262, %v766, 0.0
  %v786 = vsel %vm263, %v765, 0.0
  %v787 = vsel %vm264, %v764, 0.0
  %v788 = vrot.slane %v728, 1
  %v789 = vrot.slane %v729, 1
  %v790 = vrot.slane %v730, 1
  %v791 = vrot.slane %v731, 1
  %v792 = vrot.slane %v732, 1
  %v793 = vrot.slane %v733, 1
  %v794 = vrot.slane %v734, 1
  %v795 = vrot.slane %v735, 1
  %v796 = vrot.slane %v736, 1
  %v797 = vrot.slane %v737, 1
  %v798 = vrot.slane %v738, 1
  %v799 = vrot.slane %v739, 1
  %v800 = vsel %vm350, %v798, %v799
  %v801 = vsel %vm350, %v797, %v798
  %v802 = vsel %vm350, %v796, %v797
  %v803 = vsel %vm350, %v795, %v796
  %v804 = vsel %vm350, %v794, %v795
  %v805 = vsel %vm350, %v793, %v794
  %v806 = vsel %vm350, %v792, %v793
  %v807 = vsel %vm350, %v791, %v792
  %v808 = vsel %vm350, %v790, %v791
  %v809 = vsel %vm350, %v789, %v790
  %v810 = vsel %vm350, %v788, %v789
  %v811 = vsel %vm350, %v799, %v788
  %v812 = vsel %vm318, %v810, 0.0
  %v813 = vsel %vm319, %v809, 0.0
  %v814 = vsel %vm320, %v808, 0.0
  %v815 = vsel %vm321, %v807, 0.0
  %v816 = vsel %vm322, %v806, 0.0
  %v817 = vsel %vm323, %v805, 0.0
  %v818 = vsel %vm324, %v804, 0.0
  %v819 = vsel %vm325, %v803, 0.0
  %v820 = vsel %vm326, %v802, 0.0
  %v821 = vsel %vm327, %v801, 0.0
  %v822 = vsel %vm328, %v800, 0.0
  %v823 = vsel %vm329, %v811, 0.0
  %v824 = vrot.slane %v744, 7
  %v825 = vrot.slane %v745, 7
  %v826 = vrot.slane %v750, 7
  %v827 = vrot.slane %v751, 7
  %v828 = vsel %vm285, %v826, %v827
  %v829 = vsel %vm285, %v825, %v826
  %v830 = vsel %vm285, %v824, %v825
  %v831 = vsel %vm285, %v827, %v824
  %v832 = vsel %vm253, %v831, 0.0
  %v833 = vsel %vm254, %v830, 0.0
  %v834 = vsel %vm255, %v829, 0.0
  %v835 = vsel %vm256, %v828, 0.0
  %v836 = vrot.slane %v744, 1
  %v837 = vrot.slane %v745, 1
  %v838 = vrot.slane %v750, 1
  %v839 = vrot.slane %v751, 1
  %v840 = vsel %vm350, %v838, %v839
  %v841 = vsel %vm350, %v837, %v838
  %v842 = vsel %vm350, %v836, %v837
  %v843 = vsel %vm350, %v839, %v836
  %v844 = vsel %vm318, %v842, 0.0
  %v845 = vsel %vm319, %v841, 0.0
  %v846 = vsel %vm320, %v840, 0.0
  %v847 = vsel %vm321, %v843, 0.0
  %v848 = vld [vmem:[%s4] sm:$0xff]
  %v849 = vld [vmem:[%s4 + $0x8] sm:$0xff]
  %v850 = vld [vmem:[%s4 + $0x10] sm:$0xff]
  %v851 = vld [vmem:[%s4 + $0x18] sm:$0xff]
  %v852 = vld [vmem:[%s4 + $0x20] sm:$0xff]
  %v853 = vld [vmem:[%s4 + $0x28] sm:$0xff]
  %v854 = vld [vmem:[%s4 + $0x30] sm:$0xff]
  %v855 = vld [vmem:[%s4 + $0x38] sm:$0xff]
  %v856 = vld [vmem:[%s4 + $0x40] sm:$0xff]
  %v857 = vld [vmem:[%s4 + $0x48] sm:$0xff]
  %v858 = vld [vmem:[%s4 + $0x50] sm:$0xff]
  %v859 = vld [vmem:[%s4 + $0x58] sm:$0xff]
  %v860 = vld [vmem:[%s4 + $0x60] sm:$0xff]
  %v861 = vld [vmem:[%s4 + $0x68] sm:$0xff]
  %v862 = vld [vmem:[%s4 + $0x70] sm:$0xff]
  %v863 = vld [vmem:[%s4 + $0x78] sm:$0xff]
  %v864 = vld [vmem:[%s4 + $0x80] sm:$0xff]
  %v865 = vld [vmem:[%s4 + $0x88] sm:$0xff]
  %v866 = vld [vmem:[%s4 + $0x90] sm:$0xff]
  %v867 = vld [vmem:[%s4 + $0x98] sm:$0xff]
  %v868 = vld [vmem:[%s4 + $0xa0] sm:$0xff]
  %v869 = vld [vmem:[%s4 + $0xa8] sm:$0xff]
  %v870 = vld [vmem:[%s4 + $0xb0] sm:$0xff]
  %v871 = vld [vmem:[%s4 + $0xb8] sm:$0xff]
  %v872 = vld [vmem:[%s4 + $0xc0] sm:$0xff]
  %v873 = vld [vmem:[%s4 + $0xc8] sm:$0xff]
  %v874 = vld [vmem:[%s4 + $0xd0] sm:$0xff]
  %v875 = vld [vmem:[%s4 + $0xd8] sm:$0xff]
  %v876 = vld [vmem:[%s4 + $0xe0] sm:$0xff]
  %v877 = vld [vmem:[%s4 + $0xe8] sm:$0xff]
  %v878 = vld [vmem:[%s4 + $0xf0] sm:$0xff]
  %v879 = vld [vmem:[%s4 + $0xf8] sm:$0xff]
  %v880 = vld [vmem:[%s4 + $0x100] sm:$0xff]
  %v881 = vld [vmem:[%s4 + $0x108] sm:$0xff]
  %v882 = vld [vmem:[%s4 + $0x110] sm:$0xff]
  %v883 = vld [vmem:[%s4 + $0x118] sm:$0xff]
  %v884 = vld [vmem:[%s4 + $0x120] sm:$0xff]
  %v885 = vld [vmem:[%s4 + $0x128] sm:$0xff]
  %v886 = vld [vmem:[%s4 + $0x130] sm:$0xff]
  %v887 = vld [vmem:[%s4 + $0x138] sm:$0xff]
  %v888 = vld [vmem:[%s4 + $0x140] sm:$0xff]
  %v889 = vld [vmem:[%s4 + $0x148] sm:$0xff]
  %v890 = vld [vmem:[%s4 + $0x150] sm:$0xff]
  %v891 = vld [vmem:[%s4 + $0x158] sm:$0xff]
  %v892 = vld [vmem:[%s4 + $0x160] sm:$0xff]
  %v893 = vld [vmem:[%s4 + $0x168] sm:$0xff]
  %v894 = vld [vmem:[%s4 + $0x170] sm:$0xff]
  %v895 = vld [vmem:[%s4 + $0x178] sm:$0xff]
  %v896 = vld [vmem:[%s4 + $0x180] sm:$0xff]
  %v897 = vld [vmem:[%s4 + $0x188] sm:$0xff]
  %v898 = vld [vmem:[%s4 + $0x190] sm:$0xff]
  %v899 = vld [vmem:[%s4 + $0x198] sm:$0xff]
  %v900 = vld [vmem:[%s4 + $0x1a0] sm:$0xff]
  %v901 = vld [vmem:[%s4 + $0x1a8] sm:$0xff]
  %v902 = vld [vmem:[%s4 + $0x1b0] sm:$0xff]
  %v903 = vld [vmem:[%s4 + $0x1b8] sm:$0xff]
  %v904 = vld [vmem:[%s4 + $0x1c0] sm:$0xff]
  %v905 = vld [vmem:[%s4 + $0x1c8] sm:$0xff]
  %v906 = vld [vmem:[%s4 + $0x1d0] sm:$0xff]
  %v907 = vld [vmem:[%s4 + $0x1d8] sm:$0xff]
  %v908 = vld [vmem:[%s4 + $0x1e0] sm:$0xff]
  %v909 = vld [vmem:[%s4 + $0x1e8] sm:$0xff]
  %v910 = vld [vmem:[%s4 + $0x1f0] sm:$0xff]
  %v911 = vld [vmem:[%s4 + $0x1f8] sm:$0xff]
  %v912 = vld [vmem:[%s4 + $0x200] sm:$0xff]
  %v913 = vld [vmem:[%s4 + $0x208] sm:$0xff]
  %v914 = vld [vmem:[%s4 + $0x210] sm:$0xff]
  %v915 = vld [vmem:[%s4 + $0x218] sm:$0xff]
  %v916 = vld [vmem:[%s4 + $0x220] sm:$0xff]
  %v917 = vld [vmem:[%s4 + $0x228] sm:$0xff]
  %v918 = vld [vmem:[%s4 + $0x230] sm:$0xff]
  %v919 = vld [vmem:[%s4 + $0x238] sm:$0xff]
  %v920 = vld [vmem:[%s4 + $0x240] sm:$0xff]
  %v921 = vld [vmem:[%s4 + $0x248] sm:$0xff]
  %v922 = vld [vmem:[%s4 + $0x250] sm:$0xff]
  %v923 = vld [vmem:[%s4 + $0x258] sm:$0xff]
  %v924 = vld [vmem:[%s4 + $0x260] sm:$0xff]
  %v925 = vld [vmem:[%s4 + $0x268] sm:$0xff]
  %v926 = vld [vmem:[%s4 + $0x270] sm:$0xff]
  %v927 = vld [vmem:[%s4 + $0x278] sm:$0xff]
  %v928 = vld [vmem:[%s4 + $0x280] sm:$0xff]
  %v929 = vld [vmem:[%s4 + $0x288] sm:$0xff]
  %v930 = vld [vmem:[%s4 + $0x290] sm:$0xff]
  %v931 = vld [vmem:[%s4 + $0x298] sm:$0xff]
  %v932 = vld [vmem:[%s4 + $0x2a0] sm:$0xff]
  %v933 = vld [vmem:[%s4 + $0x2a8] sm:$0xff]
  %v934 = vld [vmem:[%s4 + $0x2b0] sm:$0xff]
  %v935 = vld [vmem:[%s4 + $0x2b8] sm:$0xff]
  %v936 = vld [vmem:[%s4 + $0x2c0] sm:$0xff]
  %v937 = vld [vmem:[%s4 + $0x2c8] sm:$0xff]
  %v938 = vld [vmem:[%s4 + $0x2d0] sm:$0xff]
  %v939 = vld [vmem:[%s4 + $0x2d8] sm:$0xff]
  %v940 = vld [vmem:[%s4 + $0x2e0] sm:$0xff]
  %v941 = vld [vmem:[%s4 + $0x2e8] sm:$0xff]
  %v942 = vld [vmem:[%s4 + $0x2f0] sm:$0xff]
  %v943 = vld [vmem:[%s4 + $0x2f8] sm:$0xff]
  %944 = vmatpush.msra.mxu0 %v878
  %945 = vmatpush.msra.mxu0 %v876
  %946 = vmatpush.msra.mxu0 %v874
  %947 = vmatpush.msra.mxu0 %v872
  %948 = vmatpush.msra.mxu0 %v870
  %949 = vmatpush.msra.mxu0 %v868
  %950 = vmatpush.msra.mxu0 %v866
  %951 = vmatpush.msra.mxu0 %v864
  %952 = vmatpush.msra.mxu0 %v862
  %953 = vmatpush.msra.mxu0 %v860
  %954 = vmatpush.msra.mxu0 %v858
  %955 = vmatpush.msra.mxu0 %v856
  %956 = vmatpush.msra.mxu0 %v854
  %957 = vmatpush.msra.mxu0 %v852
  %958 = vmatpush.msra.mxu0 %v850
  %959 = vmatpush.msra.mxu0 %v848
  %960 = vmatmul.f32.gmra.mxu0 %v776
  %v961 = vpop.f32.mrf.mxu0
  %v962 = vadd.f32 0.0, %v961
  %963 = vmatmul.f32.gmra.mxu0 %v777
  %v964 = vpop.f32.mrf.mxu0
  %v965 = vadd.f32 0.0, %v964
  %966 = vmatmul.f32.gmra.mxu0 %v778
  %v967 = vpop.f32.mrf.mxu0
  %v968 = vadd.f32 0.0, %v967
  %969 = vmatmul.f32.gmra.mxu0 %v779
  %v970 = vpop.f32.mrf.mxu0
  %v971 = vadd.f32 0.0, %v970
  %972 = vmatmul.f32.gmra.mxu0 %v780
  %v973 = vpop.f32.mrf.mxu0
  %v974 = vadd.f32 0.0, %v973
  %975 = vmatmul.f32.gmra.mxu0 %v781
  %v976 = vpop.f32.mrf.mxu0
  %v977 = vadd.f32 0.0, %v976
  %978 = vmatmul.f32.gmra.mxu0 %v782
  %v979 = vpop.f32.mrf.mxu0
  %v980 = vadd.f32 0.0, %v979
  %981 = vmatmul.f32.gmra.mxu0 %v783
  %v982 = vpop.f32.mrf.mxu0
  %v983 = vadd.f32 0.0, %v982
  %984 = vmatmul.f32.gmra.mxu0 %v784
  %v985 = vpop.f32.mrf.mxu0
  %v986 = vadd.f32 0.0, %v985
  %987 = vmatmul.f32.gmra.mxu0 %v785
  %v988 = vpop.f32.mrf.mxu0
  %v989 = vadd.f32 0.0, %v988
  %990 = vmatmul.f32.gmra.mxu0 %v786
  %v991 = vpop.f32.mrf.mxu0
  %v992 = vadd.f32 0.0, %v991
  %993 = vmatmul.f32.gmra.mxu0 %v787
  %v994 = vpop.f32.mrf.mxu0
  %v995 = vadd.f32 0.0, %v994
  %996 = vmatmul.f32.gmra.mxu0 %v832
  %v997 = vpop.f32.mrf.mxu0
  %998 = vmatmul.f32.gmra.mxu0 %v833
  %v999 = vpop.f32.mrf.mxu0
  %1000 = vmatmul.f32.gmra.mxu0 %v834
  %v1001 = vpop.f32.mrf.mxu0
  %1002 = vmatmul.f32.gmra.mxu0 %v835
  %v1003 = vpop.f32.mrf.mxu0
  %1004 = vdwg.mxu0
  %1005 = vmatpush.msra.mxu0 %v910
  %1006 = vmatpush.msra.mxu0 %v908
  %1007 = vmatpush.msra.mxu0 %v906
  %1008 = vmatpush.msra.mxu0 %v904
  %1009 = vmatpush.msra.mxu0 %v902
  %1010 = vmatpush.msra.mxu0 %v900
  %1011 = vmatpush.msra.mxu0 %v898
  %1012 = vmatpush.msra.mxu0 %v896
  %1013 = vmatpush.msra.mxu0 %v894
  %1014 = vmatpush.msra.mxu0 %v892
  %1015 = vmatpush.msra.mxu0 %v890
  %1016 = vmatpush.msra.mxu0 %v888
  %1017 = vmatpush.msra.mxu0 %v886
  %1018 = vmatpush.msra.mxu0 %v884
  %1019 = vmatpush.msra.mxu0 %v882
  %1020 = vmatpush.msra.mxu0 %v880
  %1021 = vmatmul.f32.gmra.mxu0 %v728
  %v1022 = vpop.f32.mrf.mxu0
  %v1023 = vadd.f32 %v962, %v1022
  %1024 = vmatmul.f32.gmra.mxu0 %v729
  %v1025 = vpop.f32.mrf.mxu0
  %v1026 = vadd.f32 %v965, %v1025
  %1027 = vmatmul.f32.gmra.mxu0 %v730
  %v1028 = vpop.f32.mrf.mxu0
  %v1029 = vadd.f32 %v968, %v1028
  %1030 = vmatmul.f32.gmra.mxu0 %v731
  %v1031 = vpop.f32.mrf.mxu0
  %v1032 = vadd.f32 %v971, %v1031
  %1033 = vmatmul.f32.gmra.mxu0 %v732
  %v1034 = vpop.f32.mrf.mxu0
  %v1035 = vadd.f32 %v974, %v1034
  %1036 = vmatmul.f32.gmra.mxu0 %v733
  %v1037 = vpop.f32.mrf.mxu0
  %v1038 = vadd.f32 %v977, %v1037
  %1039 = vmatmul.f32.gmra.mxu0 %v734
  %v1040 = vpop.f32.mrf.mxu0
  %v1041 = vadd.f32 %v980, %v1040
  %1042 = vmatmul.f32.gmra.mxu0 %v735
  %v1043 = vpop.f32.mrf.mxu0
  %v1044 = vadd.f32 %v983, %v1043
  %1045 = vmatmul.f32.gmra.mxu0 %v736
  %v1046 = vpop.f32.mrf.mxu0
  %v1047 = vadd.f32 %v986, %v1046
  %1048 = vmatmul.f32.gmra.mxu0 %v737
  %v1049 = vpop.f32.mrf.mxu0
  %v1050 = vadd.f32 %v989, %v1049
  %1051 = vmatmul.f32.gmra.mxu0 %v738
  %v1052 = vpop.f32.mrf.mxu0
  %v1053 = vadd.f32 %v992, %v1052
  %1054 = vmatmul.f32.gmra.mxu0 %v739
  %v1055 = vpop.f32.mrf.mxu0
  %v1056 = vadd.f32 %v995, %v1055
  %1057 = vmatmul.f32.gmra.mxu0 %v744
  %v1058 = vpop.f32.mrf.mxu0
  %1059 = vmatmul.f32.gmra.mxu0 %v745
  %v1060 = vpop.f32.mrf.mxu0
  %1061 = vmatmul.f32.gmra.mxu0 %v750
  %v1062 = vpop.f32.mrf.mxu0
  %1063 = vmatmul.f32.gmra.mxu0 %v751
  %v1064 = vpop.f32.mrf.mxu0
  %1065 = vdwg.mxu0
  %1066 = vmatpush.msra.mxu0 %v942
  %1067 = vmatpush.msra.mxu0 %v940
  %1068 = vmatpush.msra.mxu0 %v938
  %1069 = vmatpush.msra.mxu0 %v936
  %1070 = vmatpush.msra.mxu0 %v934
  %1071 = vmatpush.msra.mxu0 %v932
  %1072 = vmatpush.msra.mxu0 %v930
  %1073 = vmatpush.msra.mxu0 %v928
  %1074 = vmatpush.msra.mxu0 %v926
  %1075 = vmatpush.msra.mxu0 %v924
  %1076 = vmatpush.msra.mxu0 %v922
  %1077 = vmatpush.msra.mxu0 %v920
  %1078 = vmatpush.msra.mxu0 %v918
  %1079 = vmatpush.msra.mxu0 %v916
  %1080 = vmatpush.msra.mxu0 %v914
  %1081 = vmatpush.msra.mxu0 %v912
  %1082 = vmatmul.f32.gmra.mxu0 %v812
  %v1083 = vpop.f32.mrf.mxu0
  %v1084 = vadd.f32 %v1023, %v1083
  %1085 = vmatmul.f32.gmra.mxu0 %v813
  %v1086 = vpop.f32.mrf.mxu0
  %v1087 = vadd.f32 %v1026, %v1086
  %1088 = vmatmul.f32.gmra.mxu0 %v814
  %v1089 = vpop.f32.mrf.mxu0
  %v1090 = vadd.f32 %v1029, %v1089
  %1091 = vmatmul.f32.gmra.mxu0 %v815
  %v1092 = vpop.f32.mrf.mxu0
  %v1093 = vadd.f32 %v1032, %v1092
  %1094 = vmatmul.f32.gmra.mxu0 %v816
  %v1095 = vpop.f32.mrf.mxu0
  %v1096 = vadd.f32 %v1035, %v1095
  %1097 = vmatmul.f32.gmra.mxu0 %v817
  %v1098 = vpop.f32.mrf.mxu0
  %v1099 = vadd.f32 %v1038, %v1098
  %1100 = vmatmul.f32.gmra.mxu0 %v818
  %v1101 = vpop.f32.mrf.mxu0
  %v1102 = vadd.f32 %v1041, %v1101
  %1103 = vmatmul.f32.gmra.mxu0 %v819
  %v1104 = vpop.f32.mrf.mxu0
  %v1105 = vadd.f32 %v1044, %v1104
  %1106 = vmatmul.f32.gmra.mxu0 %v820
  %v1107 = vpop.f32.mrf.mxu0
  %v1108 = vadd.f32 %v1047, %v1107
  %1109 = vmatmul.f32.gmra.mxu0 %v821
  %v1110 = vpop.f32.mrf.mxu0
  %v1111 = vadd.f32 %v1050, %v1110
  %1112 = vmatmul.f32.gmra.mxu0 %v822
  %v1113 = vpop.f32.mrf.mxu0
  %v1114 = vadd.f32 %v1053, %v1113
  %1115 = vmatmul.f32.gmra.mxu0 %v823
  %v1116 = vpop.f32.mrf.mxu0
  %v1117 = vadd.f32 %v1056, %v1116
  %1118 = vmatmul.f32.gmra.mxu0 %v844
  %v1119 = vpop.f32.mrf.mxu0
  %1120 = vmatmul.f32.gmra.mxu0 %v845
  %v1121 = vpop.f32.mrf.mxu0
  %1122 = vmatmul.f32.gmra.mxu0 %v846
  %v1123 = vpop.f32.mrf.mxu0
  %1124 = vmatmul.f32.gmra.mxu0 %v847
  %v1125 = vpop.f32.mrf.mxu0
  %1126 = vdwg.mxu0
  %1127 = vmatpush.msra.mxu0 %v879
  %1128 = vmatpush.msra.mxu0 %v877
  %1129 = vmatpush.msra.mxu0 %v875
  %1130 = vmatpush.msra.mxu0 %v873
  %1131 = vmatpush.msra.mxu0 %v871
  %1132 = vmatpush.msra.mxu0 %v869
  %1133 = vmatpush.msra.mxu0 %v867
  %1134 = vmatpush.msra.mxu0 %v865
  %1135 = vmatpush.msra.mxu0 %v863
  %1136 = vmatpush.msra.mxu0 %v861
  %1137 = vmatpush.msra.mxu0 %v859
  %1138 = vmatpush.msra.mxu0 %v857
  %1139 = vmatpush.msra.mxu0 %v855
  %1140 = vmatpush.msra.mxu0 %v853
  %1141 = vmatpush.msra.mxu0 %v851
  %1142 = vmatpush.msra.mxu0 %v849
  %1143 = vmatmul.f32.gmra.mxu0 %v776
  %v1144 = vpop.f32.mrf.mxu0
  %1145 = vmatmul.f32.gmra.mxu0 %v777
  %v1146 = vpop.f32.mrf.mxu0
  %1147 = vmatmul.f32.gmra.mxu0 %v778
  %v1148 = vpop.f32.mrf.mxu0
  %1149 = vmatmul.f32.gmra.mxu0 %v779
  %v1150 = vpop.f32.mrf.mxu0
  %1151 = vmatmul.f32.gmra.mxu0 %v780
  %v1152 = vpop.f32.mrf.mxu0
  %1153 = vmatmul.f32.gmra.mxu0 %v781
  %v1154 = vpop.f32.mrf.mxu0
  %1155 = vmatmul.f32.gmra.mxu0 %v782
  %v1156 = vpop.f32.mrf.mxu0
  %1157 = vmatmul.f32.gmra.mxu0 %v783
  %v1158 = vpop.f32.mrf.mxu0
  %1159 = vmatmul.f32.gmra.mxu0 %v784
  %v1160 = vpop.f32.mrf.mxu0
  %1161 = vmatmul.f32.gmra.mxu0 %v785
  %v1162 = vpop.f32.mrf.mxu0
  %1163 = vmatmul.f32.gmra.mxu0 %v786
  %v1164 = vpop.f32.mrf.mxu0
  %1165 = vmatmul.f32.gmra.mxu0 %v787
  %v1166 = vpop.f32.mrf.mxu0
  %1167 = vmatmul.f32.gmra.mxu0 %v832
  %v1168 = vpop.f32.mrf.mxu0
  %v1169 = vadd.f32 0.0, %v1168
  %1170 = vmatmul.f32.gmra.mxu0 %v833
  %v1171 = vpop.f32.mrf.mxu0
  %v1172 = vadd.f32 0.0, %v1171
  %1173 = vmatmul.f32.gmra.mxu0 %v834
  %v1174 = vpop.f32.mrf.mxu0
  %v1175 = vadd.f32 0.0, %v1174
  %1176 = vmatmul.f32.gmra.mxu0 %v835
  %v1177 = vpop.f32.mrf.mxu0
  %v1178 = vadd.f32 0.0, %v1177
  %1179 = vdwg.mxu0
  %1180 = vmatpush.msra.mxu0 %v911
  %1181 = vmatpush.msra.mxu0 %v909
  %1182 = vmatpush.msra.mxu0 %v907
  %1183 = vmatpush.msra.mxu0 %v905
  %1184 = vmatpush.msra.mxu0 %v903
  %1185 = vmatpush.msra.mxu0 %v901
  %1186 = vmatpush.msra.mxu0 %v899
  %1187 = vmatpush.msra.mxu0 %v897
  %1188 = vmatpush.msra.mxu0 %v895
  %1189 = vmatpush.msra.mxu0 %v893
  %1190 = vmatpush.msra.mxu0 %v891
  %1191 = vmatpush.msra.mxu0 %v889
  %1192 = vmatpush.msra.mxu0 %v887
  %1193 = vmatpush.msra.mxu0 %v885
  %1194 = vmatpush.msra.mxu0 %v883
  %1195 = vmatpush.msra.mxu0 %v881
  %1196 = vmatmul.f32.gmra.mxu0 %v728
  %v1197 = vpop.f32.mrf.mxu0
  %1198 = vmatmul.f32.gmra.mxu0 %v729
  %v1199 = vpop.f32.mrf.mxu0
  %1200 = vmatmul.f32.gmra.mxu0 %v730
  %v1201 = vpop.f32.mrf.mxu0
  %1202 = vmatmul.f32.gmra.mxu0 %v731
  %v1203 = vpop.f32.mrf.mxu0
  %1204 = vmatmul.f32.gmra.mxu0 %v732
  %v1205 = vpop.f32.mrf.mxu0
  %1206 = vmatmul.f32.gmra.mxu0 %v733
  %v1207 = vpop.f32.mrf.mxu0
  %1208 = vmatmul.f32.gmra.mxu0 %v734
  %v1209 = vpop.f32.mrf.mxu0
  %1210 = vmatmul.f32.gmra.mxu0 %v735
  %v1211 = vpop.f32.mrf.mxu0
  %1212 = vmatmul.f32.gmra.mxu0 %v736
  %v1213 = vpop.f32.mrf.mxu0
  %1214 = vmatmul.f32.gmra.mxu0 %v737
  %v1215 = vpop.f32.mrf.mxu0
  %1216 = vmatmul.f32.gmra.mxu0 %v738
  %v1217 = vpop.f32.mrf.mxu0
  %1218 = vmatmul.f32.gmra.mxu0 %v739
  %v1219 = vpop.f32.mrf.mxu0
  %1220 = vmatmul.f32.gmra.mxu0 %v744
  %v1221 = vpop.f32.mrf.mxu0
  %v1222 = vadd.f32 %v1169, %v1221
  %1223 = vmatmul.f32.gmra.mxu0 %v745
  %v1224 = vpop.f32.mrf.mxu0
  %v1225 = vadd.f32 %v1172, %v1224
  %1226 = vmatmul.f32.gmra.mxu0 %v750
  %v1227 = vpop.f32.mrf.mxu0
  %v1228 = vadd.f32 %v1175, %v1227
  %1229 = vmatmul.f32.gmra.mxu0 %v751
  %v1230 = vpop.f32.mrf.mxu0
  %v1231 = vadd.f32 %v1178, %v1230
  %1232 = vdwg.mxu0
  %1233 = vmatpush.msra.mxu0 %v943
  %1234 = vmatpush.msra.mxu0 %v941
  %1235 = vmatpush.msra.mxu0 %v939
  %1236 = vmatpush.msra.mxu0 %v937
  %1237 = vmatpush.msra.mxu0 %v935
  %1238 = vmatpush.msra.mxu0 %v933
  %1239 = vmatpush.msra.mxu0 %v931
  %1240 = vmatpush.msra.mxu0 %v929
  %1241 = vmatpush.msra.mxu0 %v927
  %1242 = vmatpush.msra.mxu0 %v925
  %1243 = vmatpush.msra.mxu0 %v923
  %1244 = vmatpush.msra.mxu0 %v921
  %1245 = vmatpush.msra.mxu0 %v919
  %1246 = vmatpush.msra.mxu0 %v917
  %1247 = vmatpush.msra.mxu0 %v915
  %1248 = vmatpush.msra.mxu0 %v913
  %1249 = vmatmul.f32.gmra.mxu0 %v812
  %v1250 = vpop.f32.mrf.mxu0
  %1251 = vmatmul.f32.gmra.mxu0 %v813
  %v1252 = vpop.f32.mrf.mxu0
  %1253 = vmatmul.f32.gmra.mxu0 %v814
  %v1254 = vpop.f32.mrf.mxu0
  %1255 = vmatmul.f32.gmra.mxu0 %v815
  %v1256 = vpop.f32.mrf.mxu0
  %1257 = vmatmul.f32.gmra.mxu0 %v816
  %v1258 = vpop.f32.mrf.mxu0
  %1259 = vmatmul.f32.gmra.mxu0 %v817
  %v1260 = vpop.f32.mrf.mxu0
  %1261 = vmatmul.f32.gmra.mxu0 %v818
  %v1262 = vpop.f32.mrf.mxu0
  %1263 = vmatmul.f32.gmra.mxu0 %v819
  %v1264 = vpop.f32.mrf.mxu0
  %1265 = vmatmul.f32.gmra.mxu0 %v820
  %v1266 = vpop.f32.mrf.mxu0
  %1267 = vmatmul.f32.gmra.mxu0 %v821
  %v1268 = vpop.f32.mrf.mxu0
  %1269 = vmatmul.f32.gmra.mxu0 %v822
  %v1270 = vpop.f32.mrf.mxu0
  %1271 = vmatmul.f32.gmra.mxu0 %v823
  %v1272 = vpop.f32.mrf.mxu0
  %1273 = vmatmul.f32.gmra.mxu0 %v844
  %v1274 = vpop.f32.mrf.mxu0
  %v1275 = vadd.f32 %v1222, %v1274
  %1276 = vmatmul.f32.gmra.mxu0 %v845
  %v1277 = vpop.f32.mrf.mxu0
  %v1278 = vadd.f32 %v1225, %v1277
  %1279 = vmatmul.f32.gmra.mxu0 %v846
  %v1280 = vpop.f32.mrf.mxu0
  %v1281 = vadd.f32 %v1228, %v1280
  %1282 = vmatmul.f32.gmra.mxu0 %v847
  %v1283 = vpop.f32.mrf.mxu0
  %v1284 = vadd.f32 %v1231, %v1283
  %1285 = vdwg.mxu0
  %v1286 = vld [vmem:[%s5] sm:$0x1]
  %v1288 = vperm.slane %v1286, 0
  %v1290 = vadd.f32 %v1275, %v1288
  %v1291 = vadd.f32 %v1278, %v1288
  %v1292 = vadd.f32 %v1281, %v1288
  %v1293 = vadd.f32 %v1284, %v1288
  %1294 = vst [vmem:[%s7] sm:$0xff] %v1290
  %1295 = vst [vmem:[%s7 + $0x8] sm:$0xff] %v1291
  %1296 = vst [vmem:[%s7 + $0x10] sm:$0xff] %v1292
  %1297 = vst [vmem:[%s7 + $0x18] sm:$0xff] %v1293
  %v1298 = vld [vmem:[%s6] sm:$0x1]
  %v1300 = vperm.slane %v1298, 0
  %v1302 = vadd.f32 %v1084, %v1300
  %v1303 = vadd.f32 %v1087, %v1300
  %v1304 = vadd.f32 %v1090, %v1300
  %v1305 = vadd.f32 %v1093, %v1300
  %v1306 = vadd.f32 %v1096, %v1300
  %v1307 = vadd.f32 %v1099, %v1300
  %v1308 = vadd.f32 %v1102, %v1300
  %v1309 = vadd.f32 %v1105, %v1300
  %v1310 = vadd.f32 %v1108, %v1300
  %v1311 = vadd.f32 %v1111, %v1300
  %v1312 = vadd.f32 %v1114, %v1300
  %v1313 = vadd.f32 %v1117, %v1300
  %1314 = vst [vmem:[%s8] sm:$0xff] %v1302
  %1315 = vst [vmem:[%s8 + $0x8] sm:$0xff] %v1303
  %1316 = vst [vmem:[%s8 + $0x10] sm:$0xff] %v1304
  %1317 = vst [vmem:[%s8 + $0x18] sm:$0xff] %v1305
  %1318 = vst [vmem:[%s8 + $0x20] sm:$0xff] %v1306
  %1319 = vst [vmem:[%s8 + $0x28] sm:$0xff] %v1307
  %1320 = vst [vmem:[%s8 + $0x30] sm:$0xff] %v1308
  %1321 = vst [vmem:[%s8 + $0x38] sm:$0xff] %v1309
  %1322 = vst [vmem:[%s8 + $0x40] sm:$0xff] %v1310
  %1323 = vst [vmem:[%s8 + $0x48] sm:$0xff] %v1311
  %1324 = vst [vmem:[%s8 + $0x50] sm:$0xff] %v1312
  %1325 = vst [vmem:[%s8 + $0x58] sm:$0xff] %v1313
  // Predicated region
  $region30: #{cross_block_forward.1} parent=0 // pred_check
    _
  $region31: #{cross_block_forward.1} parent=0 // pred_check_branch
    %1327 = sbr.rel (0) target = $region33
  $region32: #{cross_block_forward.1} parent=0 // pred_region
    _
  $region33: #{cross_block_forward.1} parent=0 // pred_fallthru
    _
  // Predicated region
  $region34: #{cross_block_forward.1} parent=0 // pred_check
    _
  $region35: #{cross_block_forward.1} parent=0 // pred_check_branch
    %1329 = sbr.rel (0) target = $region37
  $region36: #{cross_block_forward.1} parent=0 // pred_region
    _
  $region37: #{cross_block_forward.1} parent=0 // pred_fallthru
    _
  // Predicated region
  $region38: #{cross_block_forward.1} parent=0 // pred_check
    _
  $region39: #{cross_block_forward.1} parent=0 // pred_check_branch
    %1331 = sbr.rel (0) target = $region41
  $region40: #{cross_block_forward.1} parent=0 // pred_region
    _
  $region41: #{cross_block_forward.1} parent=0 // pred_fallthru
    _
  // Predicated region
  $region42: #{cross_block_forward.1} parent=0 // pred_check
    _
  $region43: #{cross_block_forward.1} parent=0 // pred_check_branch
    %1333 = sbr.rel (0) target = $region45
  $region44: #{cross_block_forward.1} parent=0 // pred_region
    _
  $region45: #{cross_block_forward.1} parent=0 // pred_fallthru
    _

</llo_original>
